<compile_context>
chip_gen: v5e
topology: v5e:2x2
jax: 0.10.0
libtpu: 0.0.40
codegen_flags: <defaults>
</compile_context>

<pallas_src>
import functools
import math

import jax
import jax.numpy as jnp
from jax.experimental import pallas as pl
from jax.experimental.pallas import tpu as pltpu


# ------------------------------ config ------------------------------

CFG = dict(
    in_planes=3, hidden_planes=8, out_planes=3,
    dvae_vocab=32,          # dVAE_vocab_size (toy; orig 8192)
    grid=4,                 # latent grid -> width = grid*grid = 16 (orig 32 -> 1024)
    max_length=8,           # text sequence length (orig 256)
    transformer_vocab=64,   # transformer_vocab_size (toy; orig 16384)
    head_dim=8, n_heads=1,
)
CFG["width"] = CFG["grid"] * CFG["grid"]
CFG["seq"] = CFG["max_length"] + CFG["dvae_vocab"]           # == logits_input_dim
CFG["total_tokens"] = CFG["grid"] * CFG["grid"] + CFG["max_length"]

# Order in which weight arrays are passed to the fused kernel.
_WEIGHT_ORDER = (
    "enc_w1_t", "enc_b1", "enc_w2_t", "enc_b2",
    "pos_emb",
    "ln1_g", "ln1_b",
    "wqkv", "bqkv", "wo", "bo",
    "ln2_g", "ln2_b",
    "mlp_w1", "mlp_b1", "mlp_w2", "mlp_b2",
    "lnf_g", "lnf_b",
    "w_out_t", "b_out",
    "tl_ln_g", "tl_ln_b", "tl_w", "tl_b",
)


# ------------------------------ in-kernel helpers ------------------------------

def _ln(x, g, b, eps=1e-5):
    """LayerNorm over the last axis (f32 vector math)."""
    mu = jnp.mean(x, axis=-1, keepdims=True)
    var = jnp.mean(jnp.square(x - mu), axis=-1, keepdims=True)
    return (x - mu) * jax.lax.rsqrt(var + eps) * g + b


# ------------------------------ fused kernel ------------------------------

def _dalle_fused_kernel(
    # per-step (batch-block) inputs
    ximg_ref, tok_ref,
    # resident weights
    enc_w1_t, enc_b1, enc_w2_t, enc_b2,
    pos_emb,
    ln1_g, ln1_b,
    wqkv, bqkv, wo, bo,
    ln2_g, ln2_b,
    mlp_w1, mlp_b1, mlp_w2, mlp_b2,
    lnf_g, lnf_b,
    w_out_t, b_out,
    tl_ln_g, tl_ln_b, tl_w, tl_b,
    # outputs
    ids_ref, logits_ref,
    *, cfg):
  T = cfg["max_length"]
  V = cfg["dvae_vocab"]
  hd = cfg["head_dim"]
  wdt = cfg["width"]
  S = T + V
  bt = ximg_ref.shape[0]                      # batch elements in this grid step
  scale = 1.0 / math.sqrt(hd)
  f32 = jnp.float32

  # ---- dVAE encoder: 1x1 convs as channel matmuls, channels-on-sublane so the
  # ---- [bt, V, H*W] image-token tensor needs no transpose.  All f32 (tiny K;
  # ---- bf16 casts would only add VPU work and drift the argmax).
  x = ximg_ref[...]                                                 # [bt, Cin, HW]
  w1b = jnp.broadcast_to(enc_w1_t[...], (bt,) + enc_w1_t.shape)     # [bt, hid, Cin]
  h = jnp.einsum("boc,bch->boh", w1b, x, preferred_element_type=f32)
  h = jnp.maximum(h + enc_b1[...], 0.0)                             # [bt, hid, HW]
  w2b = jnp.broadcast_to(enc_w2_t[...], (bt,) + enc_w2_t.shape)     # [bt, V, hid]
  z = jnp.einsum("bvc,bch->bvh", w2b, h, preferred_element_type=f32)
  z = z + enc_b2[...]                                               # [bt, V, HW]

  # ---- fused argmax over the dVAE vocab (torch argmax(dim=1), first-max
  # ---- tie-break, torch-compatible; exact since the whole path is f32).
  mx = jnp.max(z, axis=1, keepdims=True)                            # [bt, 1, HW]
  vidx = jax.lax.broadcasted_iota(jnp.int32, z.shape, 1)
  ids_ref[...] = jnp.min(jnp.where(z == mx, vidx, V), axis=1,
                         keepdims=True).astype(jnp.int32)           # [bt, 1, HW]

  # ---- transformer sequence built in-register (no VMEM scratch round trip):
  # ---- [text-token embeddings ; image channel tokens] + positional embedding.
  x2 = jnp.concatenate([tok_ref[...] + pos_emb[0:T, :],
                        z + pos_emb[T:S, :]], axis=1)               # [bt, S, width]

  # ---- pre-LN single-head attention with fused QKV projection ----
  # (unmasked; see TODO at top — original block is causal)
  h1 = _ln(x2, ln1_g[...], ln1_b[...])
  qkv = jnp.dot(h1.reshape(bt * S, wdt), wqkv[...],
                preferred_element_type=f32) + bqkv[...]             # [bt*S, 3*hd]
  q = qkv[:, 0:hd].reshape(bt, S, hd)
  k = qkv[:, hd:2 * hd].reshape(bt, S, hd)
  v = qkv[:, 2 * hd:3 * hd].reshape(bt, S, hd)
  s = jnp.einsum("bqd,bkd->bqk", q, k, preferred_element_type=f32) * scale
  p = jnp.exp(s - jnp.max(s, axis=-1, keepdims=True))
  p = p * pl.reciprocal(jnp.sum(p, axis=-1, keepdims=True), approx=True)
  attn = jnp.einsum("bqk,bkd->bqd", p, v, preferred_element_type=f32)
  proj = jnp.dot(attn.reshape(bt * S, hd), wo[...],
                 preferred_element_type=f32) + bo[...]              # [bt*S, width]
  x2 = x2 + proj.reshape(bt, S, wdt)

  # ---- MLP block ----
  h2 = _ln(x2, ln2_g[...], ln2_b[...])
  mid = jax.nn.gelu(jnp.dot(h2.reshape(bt * S, wdt), mlp_w1[...],
                            preferred_element_type=f32) + mlp_b1[...])
  out = jnp.dot(mid, mlp_w2[...], preferred_element_type=f32) + mlp_b2[...]
  x2 = x2 + out.reshape(bt, S, wdt)

  # ---- final LN + projection to transformer vocab with PRE-TRANSPOSED w_out:
  # ---- tkn[b] = w_out_t @ hf[b]^T  ->  [bt, tv, S] directly, no identity-matmul
  # ---- transpose.  Then to_logits = LayerNorm(S) + Linear(S, total_tokens).
  hf = _ln(x2, lnf_g[...], lnf_b[...])                              # [bt, S, width]
  wob = jnp.broadcast_to(w_out_t[...], (bt,) + w_out_t.shape)       # [bt, tv, width]
  tkn = jnp.einsum("bvw,bsw->bvs", wob, hf,
                   preferred_element_type=f32) + b_out[...]         # [bt, tv, S]
  tkn = _ln(tkn, tl_ln_g[...], tl_ln_b[...])
  logits_ref[...] = jnp.einsum("bvs,st->bvt", tkn, tl_w[...],
                               preferred_element_type=f32) + tl_b[...]


# ------------------------------ params & forward ------------------------------

def init_params(key, cfg=CFG):
    def nrm(k, shape, scale=0.02):
        return scale * jax.random.normal(k, shape, dtype=jnp.float32)

    ks = iter(jax.random.split(key, 32))
    w, hd, tv = cfg["width"], cfg["head_dim"], cfg["transformer_vocab"]
    V, S, TT = cfg["dvae_vocab"], cfg["seq"], cfg["total_tokens"]
    Cin, Hd = cfg["in_planes"], cfg["hidden_planes"]
    p = {
        # dVAE encoder ("1x1 convs"), stored pre-transposed (out, in).
        "enc_w1_t": nrm(next(ks), (Hd, Cin)),
        "enc_b1": jnp.zeros((Hd, 1), jnp.float32),
        "enc_w2_t": nrm(next(ks), (V, Hd)),
        "enc_b2": jnp.zeros((V, 1), jnp.float32),
        # transformer
        "tok_emb": nrm(next(ks), (tv, w)),
        "pos_emb": nrm(next(ks), (S, w)),
        "ln1_g": jnp.ones((1, w), jnp.float32), "ln1_b": jnp.zeros((1, w), jnp.float32),
        "wqkv": nrm(next(ks), (w, 3 * hd)), "bqkv": jnp.zeros((1, 3 * hd), jnp.float32),
        "wo": nrm(next(ks), (hd, w)), "bo": jnp.zeros((1, w), jnp.float32),
        "ln2_g": jnp.ones((1, w), jnp.float32), "ln2_b": jnp.zeros((1, w), jnp.float32),
        "mlp_w1": nrm(next(ks), (w, 4 * w)), "mlp_b1": jnp.zeros((1, 4 * w), jnp.float32),
        "mlp_w2": nrm(next(ks), (4 * w, w)), "mlp_b2": jnp.zeros((1, w), jnp.float32),
        "lnf_g": jnp.ones((1, w), jnp.float32), "lnf_b": jnp.zeros((1, w), jnp.float32),
        # output projection PRE-TRANSPOSED: [tv, width]; bias as a [tv, 1] column.
        "w_out_t": nrm(next(ks), (tv, w)), "b_out": jnp.zeros((tv, 1), jnp.float32),
        # to_logits = LayerNorm(logits_input_dim) + Linear(logits_input_dim, total_tokens)
        "tl_ln_g": jnp.ones((1, S), jnp.float32), "tl_ln_b": jnp.zeros((1, S), jnp.float32),
        "tl_w": nrm(next(ks), (S, TT)), "tl_b": jnp.zeros((1, TT), jnp.float32),
    }
    return p


def dalle_forward(params, image, text, cfg=CFG, batch_block=None):
    B, Cin, H, W = image.shape
    T, V = cfg["max_length"], cfg["dvae_vocab"]
    width, tv = cfg["width"], cfg["transformer_vocab"]
    S, TT = cfg["seq"], cfg["total_tokens"]
    HW = H * W
    assert width == HW and S == T + V

    # Batch blocking: a FEW fat grid steps instead of B tiny ones.
    # Default = 2 steps of B/2 (both v7x TensorCores busy; only ~2x0.35us of
    # serial step overhead on single-TC v5e/v6e).  Override per chip if needed.
    if batch_block is None:
        batch_block = B // 2 if (B >= 2 and B % 2 == 0) else B
    bt = batch_block
    assert B % bt == 0
    n_steps = B // bt

    # NCHW -> [B, C, H*W]: a free reshape (no XLA transpose); encoder runs
    # channels-on-sublane.
    x_img = image.reshape(B, Cin, HW).astype(jnp.float32)
    # token-embedding gather stays in XLA (tiny glue op).
    tok = params["tok_emb"][text].astype(jnp.float32)               # [B, T, width]

    weights = [params[name] for name in _WEIGHT_ORDER]

    def _resident(arr):
        nd = arr.ndim
        return pl.BlockSpec(arr.shape, lambda b, nd=nd: (0,) * nd)

    grid_spec = pltpu.PrefetchScalarGridSpec(
        num_scalar_prefetch=0,
        grid=(n_steps,),
        in_specs=[
            pl.BlockSpec((bt, Cin, HW), lambda b: (b, 0, 0)),       # image block
            pl.BlockSpec((bt, T, width), lambda b: (b, 0, 0)),      # text embeddings
        ] + [_resident(wa) for wa in weights],
        out_specs=[
            pl.BlockSpec((bt, 1, HW), lambda b: (b, 0, 0)),         # ids
            pl.BlockSpec((bt, tv, TT), lambda b: (b, 0, 0)),        # logits
        ],
    )

    ids3, logits = pl.pallas_call(
        functools.partial(_dalle_fused_kernel, cfg=cfg),
        out_shape=(jax.ShapeDtypeStruct((B, 1, HW), jnp.int32),
                   jax.ShapeDtypeStruct((B, tv, TT), jnp.float32)),
        grid_spec=grid_spec,
        compiler_params=pltpu.CompilerParams(
            dimension_semantics=("parallel",)),   # batch-block axis -> both TCs on v7x
    )(x_img, tok, *weights)

    # torch returns int64 indices; int32 here (cast downstream if needed).
    ids = ids3.reshape(B, HW)
    return ids, logits


# ------------------------------ demo ------------------------------

if __name__ == "__main__":
    key = jax.random.PRNGKey(0)
    k_param, k_img, k_txt = jax.random.split(key, 3)

    params = init_params(k_param, CFG)
    image = jax.random.normal(
        k_img, (2, CFG["in_planes"], CFG["grid"], CFG["grid"]), dtype=jnp.float32)
    text = jax.random.randint(
        k_txt, (2, CFG["max_length"]), 0, CFG["transformer_vocab"], dtype=jnp.int32)

    fwd = jax.jit(lambda p, im, tx: dalle_forward(p, im, tx, CFG))
    ids, logits = fwd(params, image, text)
    jax.block_until_ready(ids)
    jax.block_until_ready(logits)

    assert ids.shape == (2, CFG["grid"] * CFG["grid"])
    assert ids.dtype == jnp.int32
    assert logits.shape == (2, CFG["transformer_vocab"], CFG["total_tokens"])
    print("KERNEL_OK")
</pallas_src>

<mosaic_0001>
module attributes {stable_mosaic.version = 11 : i64} {
  func.func @_dalle_fused_kernel(%arg0: i32, %arg1: memref<1x3x16xf32, #tpu.memory_space<vmem>>, %arg2: memref<1x8x16xf32, #tpu.memory_space<vmem>>, %arg3: memref<8x3xf32, #tpu.memory_space<vmem>>, %arg4: memref<8x1xf32, #tpu.memory_space<vmem>>, %arg5: memref<32x8xf32, #tpu.memory_space<vmem>>, %arg6: memref<32x1xf32, #tpu.memory_space<vmem>>, %arg7: memref<40x16xf32, #tpu.memory_space<vmem>>, %arg8: memref<1x16xf32, #tpu.memory_space<vmem>>, %arg9: memref<1x16xf32, #tpu.memory_space<vmem>>, %arg10: memref<16x24xf32, #tpu.memory_space<vmem>>, %arg11: memref<1x24xf32, #tpu.memory_space<vmem>>, %arg12: memref<8x16xf32, #tpu.memory_space<vmem>>, %arg13: memref<1x16xf32, #tpu.memory_space<vmem>>, %arg14: memref<1x16xf32, #tpu.memory_space<vmem>>, %arg15: memref<1x16xf32, #tpu.memory_space<vmem>>, %arg16: memref<16x64xf32, #tpu.memory_space<vmem>>, %arg17: memref<1x64xf32, #tpu.memory_space<vmem>>, %arg18: memref<64x16xf32, #tpu.memory_space<vmem>>, %arg19: memref<1x16xf32, #tpu.memory_space<vmem>>, %arg20: memref<1x16xf32, #tpu.memory_space<vmem>>, %arg21: memref<1x16xf32, #tpu.memory_space<vmem>>, %arg22: memref<64x16xf32, #tpu.memory_space<vmem>>, %arg23: memref<64x1xf32, #tpu.memory_space<vmem>>, %arg24: memref<1x40xf32, #tpu.memory_space<vmem>>, %arg25: memref<1x40xf32, #tpu.memory_space<vmem>>, %arg26: memref<40x24xf32, #tpu.memory_space<vmem>>, %arg27: memref<1x24xf32, #tpu.memory_space<vmem>>, %arg28: memref<1x1x16xi32, #tpu.memory_space<vmem>>, %arg29: memref<1x64x24xf32, #tpu.memory_space<vmem>>) attributes {dimension_semantics = [#tpu.dimension_semantics<parallel>], iteration_bounds = array<i64: 2>, scalar_prefetch = 0 : i64, scratch_operands = 0 : i64, tpu.core_type = #tpu.core_type<tc>, window_params = [{transform_indices = @transform_0, window_bounds = array<i64: 1, 3, 16>}, {transform_indices = @transform_1, window_bounds = array<i64: 1, 8, 16>}, {pipeline_mode = #tpu.pipeline_mode<synchronous>, transform_indices = @transform_2, window_bounds = array<i64: 8, 3>}, {pipeline_mode = #tpu.pipeline_mode<synchronous>, transform_indices = @transform_3, window_bounds = array<i64: 8, 1>}, {pipeline_mode = #tpu.pipeline_mode<synchronous>, transform_indices = @transform_4, window_bounds = array<i64: 32, 8>}, {pipeline_mode = #tpu.pipeline_mode<synchronous>, transform_indices = @transform_5, window_bounds = array<i64: 32, 1>}, {pipeline_mode = #tpu.pipeline_mode<synchronous>, transform_indices = @transform_6, window_bounds = array<i64: 40, 16>}, {pipeline_mode = #tpu.pipeline_mode<synchronous>, transform_indices = @transform_7, window_bounds = array<i64: 1, 16>}, {pipeline_mode = #tpu.pipeline_mode<synchronous>, transform_indices = @transform_8, window_bounds = array<i64: 1, 16>}, {pipeline_mode = #tpu.pipeline_mode<synchronous>, transform_indices = @transform_9, window_bounds = array<i64: 16, 24>}, {pipeline_mode = #tpu.pipeline_mode<synchronous>, transform_indices = @transform_10, window_bounds = array<i64: 1, 24>}, {pipeline_mode = #tpu.pipeline_mode<synchronous>, transform_indices = @transform_11, window_bounds = array<i64: 8, 16>}, {pipeline_mode = #tpu.pipeline_mode<synchronous>, transform_indices = @transform_12, window_bounds = array<i64: 1, 16>}, {pipeline_mode = #tpu.pipeline_mode<synchronous>, transform_indices = @transform_13, window_bounds = array<i64: 1, 16>}, {pipeline_mode = #tpu.pipeline_mode<synchronous>, transform_indices = @transform_14, window_bounds = array<i64: 1, 16>}, {pipeline_mode = #tpu.pipeline_mode<synchronous>, transform_indices = @transform_15, window_bounds = array<i64: 16, 64>}, {pipeline_mode = #tpu.pipeline_mode<synchronous>, transform_indices = @transform_16, window_bounds = array<i64: 1, 64>}, {pipeline_mode = #tpu.pipeline_mode<synchronous>, transform_indices = @transform_17, window_bounds = array<i64: 64, 16>}, {pipeline_mode = #tpu.pipeline_mode<synchronous>, transform_indices = @transform_18, window_bounds = array<i64: 1, 16>}, {pipeline_mode = #tpu.pipeline_mode<synchronous>, transform_indices = @transform_19, window_bounds = array<i64: 1, 16>}, {pipeline_mode = #tpu.pipeline_mode<synchronous>, transform_indices = @transform_20, window_bounds = array<i64: 1, 16>}, {pipeline_mode = #tpu.pipeline_mode<synchronous>, transform_indices = @transform_21, window_bounds = array<i64: 64, 16>}, {pipeline_mode = #tpu.pipeline_mode<synchronous>, transform_indices = @transform_22, window_bounds = array<i64: 64, 1>}, {pipeline_mode = #tpu.pipeline_mode<synchronous>, transform_indices = @transform_23, window_bounds = array<i64: 1, 40>}, {pipeline_mode = #tpu.pipeline_mode<synchronous>, transform_indices = @transform_24, window_bounds = array<i64: 1, 40>}, {pipeline_mode = #tpu.pipeline_mode<synchronous>, transform_indices = @transform_25, window_bounds = array<i64: 40, 24>}, {pipeline_mode = #tpu.pipeline_mode<synchronous>, transform_indices = @transform_26, window_bounds = array<i64: 1, 24>}, {transform_indices = @transform_27, window_bounds = array<i64: 1, 1, 16>}, {transform_indices = @transform_28, window_bounds = array<i64: 1, 64, 24>}]} {
    %c0 = arith.constant 0 : index
    %c0_0 = arith.constant 0 : index
    %c0_1 = arith.constant 0 : index
    %0 = vector.load %arg1[%c0, %c0_0, %c0_1] : memref<1x3x16xf32, #tpu.memory_space<vmem>>, vector<1x3x16xf32>
    %c0_2 = arith.constant 0 : index
    %c0_3 = arith.constant 0 : index
    %1 = vector.load %arg3[%c0_2, %c0_3] : memref<8x3xf32, #tpu.memory_space<vmem>>, vector<8x3xf32>
    %2 = vector.shape_cast %1 : vector<8x3xf32> to vector<1x8x3xf32>
    "tpu.trace_start"() <{level = 10 : i32, message = "boc,bch->boh"}> : () -> ()
    %cst = arith.constant dense<0.000000e+00> : vector<1x8x16xf32>
    %3 = tpu.matmul %2, %0, %cst {dimension_numbers = #tpu.dot_dimension_numbers<[2], [1], [1], [2], [0, 0, 0, 1, 1, 2], [0], [0]>} : vector<1x8x3xf32>, vector<1x3x16xf32>, vector<1x8x16xf32> -> vector<1x8x16xf32>
    "tpu.trace_stop"() : () -> ()
    %c0_4 = arith.constant 0 : index
    %c0_5 = arith.constant 0 : index
    %4 = vector.load %arg4[%c0_4, %c0_5] : memref<8x1xf32, #tpu.memory_space<vmem>>, vector<8x1xf32>
    %5 = vector.shape_cast %4 : vector<8x1xf32> to vector<1x8x1xf32>
    %6 = vector.broadcast %5 : vector<1x8x1xf32> to vector<1x8x16xf32>
    %7 = arith.addf %3, %6 : vector<1x8x16xf32>
    %cst_6 = arith.constant 0.000000e+00 : f32
    %8 = vector.broadcast %cst_6 : f32 to vector<1x8x16xf32>
    %9 = arith.maximumf %7, %8 : vector<1x8x16xf32>
    %c0_7 = arith.constant 0 : index
    %c0_8 = arith.constant 0 : index
    %10 = vector.load %arg5[%c0_7, %c0_8] : memref<32x8xf32, #tpu.memory_space<vmem>>, vector<32x8xf32>
    %11 = vector.shape_cast %10 : vector<32x8xf32> to vector<1x32x8xf32>
    "tpu.trace_start"() <{level = 10 : i32, message = "bvc,bch->bvh"}> : () -> ()
    %cst_9 = arith.constant dense<0.000000e+00> : vector<1x32x16xf32>
    %12 = tpu.matmul %11, %9, %cst_9 {dimension_numbers = #tpu.dot_dimension_numbers<[2], [1], [1], [2], [0, 0, 0, 1, 1, 2], [0], [0]>} : vector<1x32x8xf32>, vector<1x8x16xf32>, vector<1x32x16xf32> -> vector<1x32x16xf32>
    "tpu.trace_stop"() : () -> ()
    %c0_10 = arith.constant 0 : index
    %c0_11 = arith.constant 0 : index
    %13 = vector.load %arg6[%c0_10, %c0_11] : memref<32x1xf32, #tpu.memory_space<vmem>>, vector<32x1xf32>
    %14 = vector.shape_cast %13 : vector<32x1xf32> to vector<1x32x1xf32>
    %15 = vector.broadcast %14 : vector<1x32x1xf32> to vector<1x32x16xf32>
    %16 = arith.addf %12, %15 : vector<1x32x16xf32>
    %cst_12 = arith.constant dense<0xFF800000> : vector<1x16xf32>
    %17 = vector.multi_reduction <maximumf>, %16, %cst_12 [1] : vector<1x32x16xf32> to vector<1x16xf32>
    %18 = vector.shape_cast %17 : vector<1x16xf32> to vector<1x1x16xf32>
    %19 = tpu.iota {dimensions = array<i32: 1>} : vector<1x32x16xi32>
    %20 = vector.broadcast %18 : vector<1x1x16xf32> to vector<1x32x16xf32>
    %21 = arith.cmpf oeq, %16, %20 : vector<1x32x16xf32>
    %c32_i32 = arith.constant 32 : i32
    %22 = vector.broadcast %c32_i32 : i32 to vector<1x32x16xi32>
    %23 = arith.select %21, %19, %22 : vector<1x32x16xi1>, vector<1x32x16xi32>
    %cst_13 = arith.constant dense<2147483647> : vector<1x16xi32>
    %24 = vector.multi_reduction <minsi>, %23, %cst_13 [1] : vector<1x32x16xi32> to vector<1x16xi32>
    %25 = vector.shape_cast %24 : vector<1x16xi32> to vector<1x1x16xi32>
    %c0_14 = arith.constant 0 : index
    %c0_15 = arith.constant 0 : index
    %c0_16 = arith.constant 0 : index
    %26 = vector.load %arg28[%c0_14, %c0_15, %c0_16] : memref<1x1x16xi32, #tpu.memory_space<vmem>>, vector<1x1x16xi32>
    tpu.vector_store %arg28[%c0_14, %c0_15, %c0_16], %25 {strides = array<i32>} : memref<1x1x16xi32, #tpu.memory_space<vmem>>, vector<1x1x16xi32>,
    %c0_17 = arith.constant 0 : index
    %c0_18 = arith.constant 0 : index
    %c0_19 = arith.constant 0 : index
    %27 = vector.load %arg2[%c0_17, %c0_18, %c0_19] : memref<1x8x16xf32, #tpu.memory_space<vmem>>, vector<1x8x16xf32>
    %c0_20 = arith.constant 0 : index
    %c0_21 = arith.constant 0 : index
    %28 = vector.load %arg7[%c0_20, %c0_21] : memref<40x16xf32, #tpu.memory_space<vmem>>, vector<8x16xf32>
    %29 = vector.shape_cast %28 : vector<8x16xf32> to vector<1x8x16xf32>
    %30 = arith.addf %27, %29 : vector<1x8x16xf32>
    %c8 = arith.constant 8 : index
    %c0_22 = arith.constant 0 : index
    %31 = vector.load %arg7[%c8, %c0_22] : memref<40x16xf32, #tpu.memory_space<vmem>>, vector<32x16xf32>
    %32 = vector.shape_cast %31 : vector<32x16xf32> to vector<1x32x16xf32>
    %33 = arith.addf %16, %32 : vector<1x32x16xf32>
    %34 = tpu.concatenate %30, %33 in 1 : vector<1x8x16xf32>, vector<1x32x16xf32> -> vector<1x40x16xf32>
    %c0_23 = arith.constant 0 : index
    %c0_24 = arith.constant 0 : index
    %35 = vector.load %arg8[%c0_23, %c0_24] : memref<1x16xf32, #tpu.memory_space<vmem>>, vector<1x16xf32>
    %c0_25 = arith.constant 0 : index
    %c0_26 = arith.constant 0 : index
    %36 = vector.load %arg9[%c0_25, %c0_26] : memref<1x16xf32, #tpu.memory_space<vmem>>, vector<1x16xf32>
    %cst_27 = arith.constant dense<0.000000e+00> : vector<1x40xf32>
    %37 = vector.multi_reduction <add>, %34, %cst_27 [2] : vector<1x40x16xf32> to vector<1x40xf32>
    %38 = vector.shape_cast %37 : vector<1x40xf32> to vector<1x40x1xf32>
    %cst_28 = arith.constant 1.600000e+01 : f32
    %39 = vector.broadcast %cst_28 : f32 to vector<1x40x1xf32>
    %40 = arith.divf %38, %39 : vector<1x40x1xf32>
    %41 = vector.broadcast %40 : vector<1x40x1xf32> to vector<1x40x16xf32>
    %42 = arith.subf %34, %41 : vector<1x40x16xf32>
    %43 = arith.mulf %42, %42 : vector<1x40x16xf32>
    %cst_29 = arith.constant dense<0.000000e+00> : vector<1x40xf32>
    %44 = vector.multi_reduction <add>, %43, %cst_29 [2] : vector<1x40x16xf32> to vector<1x40xf32>
    %45 = vector.shape_cast %44 : vector<1x40xf32> to vector<1x40x1xf32>
    %cst_30 = arith.constant 1.600000e+01 : f32
    %46 = vector.broadcast %cst_30 : f32 to vector<1x40x1xf32>
    %47 = arith.divf %45, %46 : vector<1x40x1xf32>
    %48 = vector.broadcast %40 : vector<1x40x1xf32> to vector<1x40x16xf32>
    %49 = arith.subf %34, %48 : vector<1x40x16xf32>
    %cst_31 = arith.constant 9.99999974E-6 : f32
    %50 = vector.broadcast %cst_31 : f32 to vector<1x40x1xf32>
    %51 = arith.addf %47, %50 : vector<1x40x1xf32>
    %52 = math.rsqrt %51 : vector<1x40x1xf32>
    %53 = vector.broadcast %52 : vector<1x40x1xf32> to vector<1x40x16xf32>
    %54 = arith.mulf %49, %53 : vector<1x40x16xf32>
    %55 = vector.shape_cast %35 : vector<1x16xf32> to vector<1x1x16xf32>
    %56 = vector.broadcast %55 : vector<1x1x16xf32> to vector<1x40x16xf32>
    %57 = arith.mulf %54, %56 : vector<1x40x16xf32>
    %58 = vector.shape_cast %36 : vector<1x16xf32> to vector<1x1x16xf32>
    %59 = vector.broadcast %58 : vector<1x1x16xf32> to vector<1x40x16xf32>
    %60 = arith.addf %57, %59 : vector<1x40x16xf32>
    %61 = vector.shape_cast %60 : vector<1x40x16xf32> to vector<40x16xf32>
    %c0_32 = arith.constant 0 : index
    %c0_33 = arith.constant 0 : index
    %62 = vector.load %arg10[%c0_32, %c0_33] : memref<16x24xf32, #tpu.memory_space<vmem>>, vector<16x24xf32>
    %cst_34 = arith.constant dense<0.000000e+00> : vector<40x24xf32>
    %63 = tpu.matmul %61, %62, %cst_34 {dimension_numbers = #tpu.dot_dimension_numbers<[1], [0], [0], [1], [0, 0, 1, 1], [], []>} : vector<40x16xf32>, vector<16x24xf32>, vector<40x24xf32> -> vector<40x24xf32>
    %c0_35 = arith.constant 0 : index
    %c0_36 = arith.constant 0 : index
    %64 = vector.load %arg11[%c0_35, %c0_36] : memref<1x24xf32, #tpu.memory_space<vmem>>, vector<1x24xf32>
    %65 = vector.broadcast %64 : vector<1x24xf32> to vector<40x24xf32>
    %66 = arith.addf %63, %65 : vector<40x24xf32>
    %67 = vector.extract_strided_slice %66 {offsets = [0, 0], sizes = [40, 8], strides = [1, 1]} : vector<40x24xf32> to vector<40x8xf32>
    %68 = vector.shape_cast %67 : vector<40x8xf32> to vector<1x40x8xf32>
    %69 = vector.extract_strided_slice %66 {offsets = [0, 8], sizes = [40, 8], strides = [1, 1]} : vector<40x24xf32> to vector<40x8xf32>
    %70 = vector.shape_cast %69 : vector<40x8xf32> to vector<1x40x8xf32>
    %71 = vector.extract_strided_slice %66 {offsets = [0, 16], sizes = [40, 8], strides = [1, 1]} : vector<40x24xf32> to vector<40x8xf32>
    %72 = vector.shape_cast %71 : vector<40x8xf32> to vector<1x40x8xf32>
    "tpu.trace_start"() <{level = 10 : i32, message = "bqd,bkd->bqk"}> : () -> ()
    %cst_37 = arith.constant dense<0.000000e+00> : vector<1x40x40xf32>
    %73 = tpu.matmul %68, %70, %cst_37 {dimension_numbers = #tpu.dot_dimension_numbers<[2], [2], [1], [1], [0, 0, 0, 1, 1, 1], [0], [0]>} : vector<1x40x8xf32>, vector<1x40x8xf32>, vector<1x40x40xf32> -> vector<1x40x40xf32>
    "tpu.trace_stop"() : () -> ()
    %cst_38 = arith.constant 0.353553385 : f32
    %74 = vector.broadcast %cst_38 : f32 to vector<1x40x40xf32>
    %75 = arith.mulf %73, %74 : vector<1x40x40xf32>
    %cst_39 = arith.constant dense<0xFF800000> : vector<1x40xf32>
    %76 = vector.multi_reduction <maximumf>, %75, %cst_39 [2] : vector<1x40x40xf32> to vector<1x40xf32>
    %77 = vector.shape_cast %76 : vector<1x40xf32> to vector<1x40x1xf32>
    %78 = vector.broadcast %77 : vector<1x40x1xf32> to vector<1x40x40xf32>
    %79 = arith.subf %75, %78 : vector<1x40x40xf32>
    %80 = math.exp %79 : vector<1x40x40xf32>
    %cst_40 = arith.constant dense<0.000000e+00> : vector<1x40xf32>
    %81 = vector.multi_reduction <add>, %80, %cst_40 [2] : vector<1x40x40xf32> to vector<1x40xf32>
    %82 = vector.shape_cast %81 : vector<1x40xf32> to vector<1x40x1xf32>
    %83 = tpu.reciprocal %82 {approx = true} : vector<1x40x1xf32> -> vector<1x40x1xf32>
    %84 = vector.broadcast %83 : vector<1x40x1xf32> to vector<1x40x40xf32>
    %85 = arith.mulf %80, %84 : vector<1x40x40xf32>
    "tpu.trace_start"() <{level = 10 : i32, message = "bqk,bkd->bqd"}> : () -> ()
    %cst_41 = arith.constant dense<0.000000e+00> : vector<1x40x8xf32>
    %86 = tpu.matmul %85, %72, %cst_41 {dimension_numbers = #tpu.dot_dimension_numbers<[2], [1], [1], [2], [0, 0, 0, 1, 1, 2], [0], [0]>} : vector<1x40x40xf32>, vector<1x40x8xf32>, vector<1x40x8xf32> -> vector<1x40x8xf32>
    "tpu.trace_stop"() : () -> ()
    %87 = vector.shape_cast %86 : vector<1x40x8xf32> to vector<40x8xf32>
    %c0_42 = arith.constant 0 : index
    %c0_43 = arith.constant 0 : index
    %88 = vector.load %arg12[%c0_42, %c0_43] : memref<8x16xf32, #tpu.memory_space<vmem>>, vector<8x16xf32>
    %cst_44 = arith.constant dense<0.000000e+00> : vector<40x16xf32>
    %89 = tpu.matmul %87, %88, %cst_44 {dimension_numbers = #tpu.dot_dimension_numbers<[1], [0], [0], [1], [0, 0, 1, 1], [], []>} : vector<40x8xf32>, vector<8x16xf32>, vector<40x16xf32> -> vector<40x16xf32>
    %c0_45 = arith.constant 0 : index
    %c0_46 = arith.constant 0 : index
    %90 = vector.load %arg13[%c0_45, %c0_46] : memref<1x16xf32, #tpu.memory_space<vmem>>, vector<1x16xf32>
    %91 = vector.broadcast %90 : vector<1x16xf32> to vector<40x16xf32>
    %92 = arith.addf %89, %91 : vector<40x16xf32>
    %93 = vector.shape_cast %92 : vector<40x16xf32> to vector<1x40x16xf32>
    %94 = arith.addf %34, %93 : vector<1x40x16xf32>
    %c0_47 = arith.constant 0 : index
    %c0_48 = arith.constant 0 : index
    %95 = vector.load %arg14[%c0_47, %c0_48] : memref<1x16xf32, #tpu.memory_space<vmem>>, vector<1x16xf32>
    %c0_49 = arith.constant 0 : index
    %c0_50 = arith.constant 0 : index
    %96 = vector.load %arg15[%c0_49, %c0_50] : memref<1x16xf32, #tpu.memory_space<vmem>>, vector<1x16xf32>
    %cst_51 = arith.constant dense<0.000000e+00> : vector<1x40xf32>
    %97 = vector.multi_reduction <add>, %94, %cst_51 [2] : vector<1x40x16xf32> to vector<1x40xf32>
    %98 = vector.shape_cast %97 : vector<1x40xf32> to vector<1x40x1xf32>
    %cst_52 = arith.constant 1.600000e+01 : f32
    %99 = vector.broadcast %cst_52 : f32 to vector<1x40x1xf32>
    %100 = arith.divf %98, %99 : vector<1x40x1xf32>
    %101 = vector.broadcast %100 : vector<1x40x1xf32> to vector<1x40x16xf32>
    %102 = arith.subf %94, %101 : vector<1x40x16xf32>
    %103 = arith.mulf %102, %102 : vector<1x40x16xf32>
    %cst_53 = arith.constant dense<0.000000e+00> : vector<1x40xf32>
    %104 = vector.multi_reduction <add>, %103, %cst_53 [2] : vector<1x40x16xf32> to vector<1x40xf32>
    %105 = vector.shape_cast %104 : vector<1x40xf32> to vector<1x40x1xf32>
    %cst_54 = arith.constant 1.600000e+01 : f32
    %106 = vector.broadcast %cst_54 : f32 to vector<1x40x1xf32>
    %107 = arith.divf %105, %106 : vector<1x40x1xf32>
    %108 = vector.broadcast %100 : vector<1x40x1xf32> to vector<1x40x16xf32>
    %109 = arith.subf %94, %108 : vector<1x40x16xf32>
    %cst_55 = arith.constant 9.99999974E-6 : f32
    %110 = vector.broadcast %cst_55 : f32 to vector<1x40x1xf32>
    %111 = arith.addf %107, %110 : vector<1x40x1xf32>
    %112 = math.rsqrt %111 : vector<1x40x1xf32>
    %113 = vector.broadcast %112 : vector<1x40x1xf32> to vector<1x40x16xf32>
    %114 = arith.mulf %109, %113 : vector<1x40x16xf32>
    %115 = vector.shape_cast %95 : vector<1x16xf32> to vector<1x1x16xf32>
    %116 = vector.broadcast %115 : vector<1x1x16xf32> to vector<1x40x16xf32>
    %117 = arith.mulf %114, %116 : vector<1x40x16xf32>
    %118 = vector.shape_cast %96 : vector<1x16xf32> to vector<1x1x16xf32>
    %119 = vector.broadcast %118 : vector<1x1x16xf32> to vector<1x40x16xf32>
    %120 = arith.addf %117, %119 : vector<1x40x16xf32>
    %121 = vector.shape_cast %120 : vector<1x40x16xf32> to vector<40x16xf32>
    %c0_56 = arith.constant 0 : index
    %c0_57 = arith.constant 0 : index
    %122 = vector.load %arg16[%c0_56, %c0_57] : memref<16x64xf32, #tpu.memory_space<vmem>>, vector<16x64xf32>
    %cst_58 = arith.constant dense<0.000000e+00> : vector<40x64xf32>
    %123 = tpu.matmul %121, %122, %cst_58 {dimension_numbers = #tpu.dot_dimension_numbers<[1], [0], [0], [1], [0, 0, 1, 1], [], []>} : vector<40x16xf32>, vector<16x64xf32>, vector<40x64xf32> -> vector<40x64xf32>
    %c0_59 = arith.constant 0 : index
    %c0_60 = arith.constant 0 : index
    %124 = vector.load %arg17[%c0_59, %c0_60] : memref<1x64xf32, #tpu.memory_space<vmem>>, vector<1x64xf32>
    %125 = vector.broadcast %124 : vector<1x64xf32> to vector<40x64xf32>
    %126 = arith.addf %123, %125 : vector<40x64xf32>
    %127 = arith.mulf %126, %126 : vector<40x64xf32>
    %128 = arith.mulf %126, %127 : vector<40x64xf32>
    %cst_61 = arith.constant 4.471500e-02 : f32
    %129 = vector.broadcast %cst_61 : f32 to vector<40x64xf32>
    %130 = arith.mulf %129, %128 : vector<40x64xf32>
    %131 = arith.addf %126, %130 : vector<40x64xf32>
    %cst_62 = arith.constant 0.797884583 : f32
    %132 = vector.broadcast %cst_62 : f32 to vector<40x64xf32>
    %133 = arith.mulf %132, %131 : vector<40x64xf32>
    %134 = math.tanh %133 : vector<40x64xf32>
    %cst_63 = arith.constant 1.000000e+00 : f32
    %135 = vector.broadcast %cst_63 : f32 to vector<40x64xf32>
    %136 = arith.addf %135, %134 : vector<40x64xf32>
    %cst_64 = arith.constant 5.000000e-01 : f32
    %137 = vector.broadcast %cst_64 : f32 to vector<40x64xf32>
    %138 = arith.mulf %137, %136 : vector<40x64xf32>
    %139 = arith.mulf %126, %138 : vector<40x64xf32>
    %c0_65 = arith.constant 0 : index
    %c0_66 = arith.constant 0 : index
    %140 = vector.load %arg18[%c0_65, %c0_66] : memref<64x16xf32, #tpu.memory_space<vmem>>, vector<64x16xf32>
    %cst_67 = arith.constant dense<0.000000e+00> : vector<40x16xf32>
    %141 = tpu.matmul %139, %140, %cst_67 {dimension_numbers = #tpu.dot_dimension_numbers<[1], [0], [0], [1], [0, 0, 1, 1], [], []>} : vector<40x64xf32>, vector<64x16xf32>, vector<40x16xf32> -> vector<40x16xf32>
    %c0_68 = arith.constant 0 : index
    %c0_69 = arith.constant 0 : index
    %142 = vector.load %arg19[%c0_68, %c0_69] : memref<1x16xf32, #tpu.memory_space<vmem>>, vector<1x16xf32>
    %143 = vector.broadcast %142 : vector<1x16xf32> to vector<40x16xf32>
    %144 = arith.addf %141, %143 : vector<40x16xf32>
    %145 = vector.shape_cast %144 : vector<40x16xf32> to vector<1x40x16xf32>
    %146 = arith.addf %94, %145 : vector<1x40x16xf32>
    %c0_70 = arith.constant 0 : index
    %c0_71 = arith.constant 0 : index
    %147 = vector.load %arg20[%c0_70, %c0_71] : memref<1x16xf32, #tpu.memory_space<vmem>>, vector<1x16xf32>
    %c0_72 = arith.constant 0 : index
    %c0_73 = arith.constant 0 : index
    %148 = vector.load %arg21[%c0_72, %c0_73] : memref<1x16xf32, #tpu.memory_space<vmem>>, vector<1x16xf32>
    %cst_74 = arith.constant dense<0.000000e+00> : vector<1x40xf32>
    %149 = vector.multi_reduction <add>, %146, %cst_74 [2] : vector<1x40x16xf32> to vector<1x40xf32>
    %150 = vector.shape_cast %149 : vector<1x40xf32> to vector<1x40x1xf32>
    %cst_75 = arith.constant 1.600000e+01 : f32
    %151 = vector.broadcast %cst_75 : f32 to vector<1x40x1xf32>
    %152 = arith.divf %150, %151 : vector<1x40x1xf32>
    %153 = vector.broadcast %152 : vector<1x40x1xf32> to vector<1x40x16xf32>
    %154 = arith.subf %146, %153 : vector<1x40x16xf32>
    %155 = arith.mulf %154, %154 : vector<1x40x16xf32>
    %cst_76 = arith.constant dense<0.000000e+00> : vector<1x40xf32>
    %156 = vector.multi_reduction <add>, %155, %cst_76 [2] : vector<1x40x16xf32> to vector<1x40xf32>
    %157 = vector.shape_cast %156 : vector<1x40xf32> to vector<1x40x1xf32>
    %cst_77 = arith.constant 1.600000e+01 : f32
    %158 = vector.broadcast %cst_77 : f32 to vector<1x40x1xf32>
    %159 = arith.divf %157, %158 : vector<1x40x1xf32>
    %160 = vector.broadcast %152 : vector<1x40x1xf32> to vector<1x40x16xf32>
    %161 = arith.subf %146, %160 : vector<1x40x16xf32>
    %cst_78 = arith.constant 9.99999974E-6 : f32
    %162 = vector.broadcast %cst_78 : f32 to vector<1x40x1xf32>
    %163 = arith.addf %159, %162 : vector<1x40x1xf32>
    %164 = math.rsqrt %163 : vector<1x40x1xf32>
    %165 = vector.broadcast %164 : vector<1x40x1xf32> to vector<1x40x16xf32>
    %166 = arith.mulf %161, %165 : vector<1x40x16xf32>
    %167 = vector.shape_cast %147 : vector<1x16xf32> to vector<1x1x16xf32>
    %168 = vector.broadcast %167 : vector<1x1x16xf32> to vector<1x40x16xf32>
    %169 = arith.mulf %166, %168 : vector<1x40x16xf32>
    %170 = vector.shape_cast %148 : vector<1x16xf32> to vector<1x1x16xf32>
    %171 = vector.broadcast %170 : vector<1x1x16xf32> to vector<1x40x16xf32>
    %172 = arith.addf %169, %171 : vector<1x40x16xf32>
    %c0_79 = arith.constant 0 : index
    %c0_80 = arith.constant 0 : index
    %173 = vector.load %arg22[%c0_79, %c0_80] : memref<64x16xf32, #tpu.memory_space<vmem>>, vector<64x16xf32>
    %174 = vector.shape_cast %173 : vector<64x16xf32> to vector<1x64x16xf32>
    "tpu.trace_start"() <{level = 10 : i32, message = "bvw,bsw->bvs"}> : () -> ()
    %cst_81 = arith.constant dense<0.000000e+00> : vector<1x64x40xf32>
    %175 = tpu.matmul %174, %172, %cst_81 {dimension_numbers = #tpu.dot_dimension_numbers<[2], [2], [1], [1], [0, 0, 0, 1, 1, 1], [0], [0]>} : vector<1x64x16xf32>, vector<1x40x16xf32>, vector<1x64x40xf32> -> vector<1x64x40xf32>
    "tpu.trace_stop"() : () -> ()
    %c0_82 = arith.constant 0 : index
    %c0_83 = arith.constant 0 : index
    %176 = vector.load %arg23[%c0_82, %c0_83] : memref<64x1xf32, #tpu.memory_space<vmem>>, vector<64x1xf32>
    %177 = vector.shape_cast %176 : vector<64x1xf32> to vector<1x64x1xf32>
    %178 = vector.broadcast %177 : vector<1x64x1xf32> to vector<1x64x40xf32>
    %179 = arith.addf %175, %178 : vector<1x64x40xf32>
    %c0_84 = arith.constant 0 : index
    %c0_85 = arith.constant 0 : index
    %180 = vector.load %arg24[%c0_84, %c0_85] : memref<1x40xf32, #tpu.memory_space<vmem>>, vector<1x40xf32>
    %c0_86 = arith.constant 0 : index
    %c0_87 = arith.constant 0 : index
    %181 = vector.load %arg25[%c0_86, %c0_87] : memref<1x40xf32, #tpu.memory_space<vmem>>, vector<1x40xf32>
    %cst_88 = arith.constant dense<0.000000e+00> : vector<1x64xf32>
    %182 = vector.multi_reduction <add>, %179, %cst_88 [2] : vector<1x64x40xf32> to vector<1x64xf32>
    %183 = vector.shape_cast %182 : vector<1x64xf32> to vector<1x64x1xf32>
    %cst_89 = arith.constant 4.000000e+01 : f32
    %184 = vector.broadcast %cst_89 : f32 to vector<1x64x1xf32>
    %185 = arith.divf %183, %184 : vector<1x64x1xf32>
    %186 = vector.broadcast %185 : vector<1x64x1xf32> to vector<1x64x40xf32>
    %187 = arith.subf %179, %186 : vector<1x64x40xf32>
    %188 = arith.mulf %187, %187 : vector<1x64x40xf32>
    %cst_90 = arith.constant dense<0.000000e+00> : vector<1x64xf32>
    %189 = vector.multi_reduction <add>, %188, %cst_90 [2] : vector<1x64x40xf32> to vector<1x64xf32>
    %190 = vector.shape_cast %189 : vector<1x64xf32> to vector<1x64x1xf32>
    %cst_91 = arith.constant 4.000000e+01 : f32
    %191 = vector.broadcast %cst_91 : f32 to vector<1x64x1xf32>
    %192 = arith.divf %190, %191 : vector<1x64x1xf32>
    %193 = vector.broadcast %185 : vector<1x64x1xf32> to vector<1x64x40xf32>
    %194 = arith.subf %179, %193 : vector<1x64x40xf32>
    %cst_92 = arith.constant 9.99999974E-6 : f32
    %195 = vector.broadcast %cst_92 : f32 to vector<1x64x1xf32>
    %196 = arith.addf %192, %195 : vector<1x64x1xf32>
    %197 = math.rsqrt %196 : vector<1x64x1xf32>
    %198 = vector.broadcast %197 : vector<1x64x1xf32> to vector<1x64x40xf32>
    %199 = arith.mulf %194, %198 : vector<1x64x40xf32>
    %200 = vector.shape_cast %180 : vector<1x40xf32> to vector<1x1x40xf32>
    %201 = vector.broadcast %200 : vector<1x1x40xf32> to vector<1x64x40xf32>
    %202 = arith.mulf %199, %201 : vector<1x64x40xf32>
    %203 = vector.shape_cast %181 : vector<1x40xf32> to vector<1x1x40xf32>
    %204 = vector.broadcast %203 : vector<1x1x40xf32> to vector<1x64x40xf32>
    %205 = arith.addf %202, %204 : vector<1x64x40xf32>
    %c0_93 = arith.constant 0 : index
    %c0_94 = arith.constant 0 : index
    %206 = vector.load %arg26[%c0_93, %c0_94] : memref<40x24xf32, #tpu.memory_space<vmem>>, vector<40x24xf32>
    "tpu.trace_start"() <{level = 10 : i32, message = "bvs,st->bvt"}> : () -> ()
    %cst_95 = arith.constant dense<0.000000e+00> : vector<1x64x24xf32>
    %207 = tpu.matmul %205, %206, %cst_95 {dimension_numbers = #tpu.dot_dimension_numbers<[2], [0], [0, 1], [1], [0, 0, 0, 1, 1, 1], [], []>} : vector<1x64x40xf32>, vector<40x24xf32>, vector<1x64x24xf32> -> vector<1x64x24xf32>
    "tpu.trace_stop"() : () -> ()
    %c0_96 = arith.constant 0 : index
    %c0_97 = arith.constant 0 : index
    %208 = vector.load %arg27[%c0_96, %c0_97] : memref<1x24xf32, #tpu.memory_space<vmem>>, vector<1x24xf32>
    %209 = vector.shape_cast %208 : vector<1x24xf32> to vector<1x1x24xf32>
    %210 = vector.broadcast %209 : vector<1x1x24xf32> to vector<1x64x24xf32>
    %211 = arith.addf %207, %210 : vector<1x64x24xf32>
    %c0_98 = arith.constant 0 : index
    %c0_99 = arith.constant 0 : index
    %c0_100 = arith.constant 0 : index
    %212 = vector.load %arg29[%c0_98, %c0_99, %c0_100] : memref<1x64x24xf32, #tpu.memory_space<vmem>>, vector<1x64x24xf32>
    tpu.vector_store %arg29[%c0_98, %c0_99, %c0_100], %211 {strides = array<i32>} : memref<1x64x24xf32, #tpu.memory_space<vmem>>, vector<1x64x24xf32>,
    return
  }
  func.func @transform_0(%arg0: i32) -> (i32, i32, i32) {
    %c0_i32 = arith.constant 0 : i32
    %c0_i32_0 = arith.constant 0 : i32
    %c0_i32_1 = arith.constant 0 : i32
    return %arg0, %c0_i32, %c0_i32_0 : i32, i32, i32
  }
  func.func @transform_1(%arg0: i32) -> (i32, i32, i32) {
    %c0_i32 = arith.constant 0 : i32
    %c0_i32_0 = arith.constant 0 : i32
    %c0_i32_1 = arith.constant 0 : i32
    return %arg0, %c0_i32, %c0_i32_0 : i32, i32, i32
  }
  func.func @transform_2(%arg0: i32) -> (i32, i32) {
    %c0_i32 = arith.constant 0 : i32
    %c0_i32_0 = arith.constant 0 : i32
    %c0_i32_1 = arith.constant 0 : i32
    return %c0_i32, %c0_i32_0 : i32, i32
  }
  func.func @transform_3(%arg0: i32) -> (i32, i32) {
    %c0_i32 = arith.constant 0 : i32
    %c0_i32_0 = arith.constant 0 : i32
    %c0_i32_1 = arith.constant 0 : i32
    return %c0_i32, %c0_i32_0 : i32, i32
  }
  func.func @transform_4(%arg0: i32) -> (i32, i32) {
    %c0_i32 = arith.constant 0 : i32
    %c0_i32_0 = arith.constant 0 : i32
    %c0_i32_1 = arith.constant 0 : i32
    return %c0_i32, %c0_i32_0 : i32, i32
  }
  func.func @transform_5(%arg0: i32) -> (i32, i32) {
    %c0_i32 = arith.constant 0 : i32
    %c0_i32_0 = arith.constant 0 : i32
    %c0_i32_1 = arith.constant 0 : i32
    return %c0_i32, %c0_i32_0 : i32, i32
  }
  func.func @transform_6(%arg0: i32) -> (i32, i32) {
    %c0_i32 = arith.constant 0 : i32
    %c0_i32_0 = arith.constant 0 : i32
    %c0_i32_1 = arith.constant 0 : i32
    return %c0_i32, %c0_i32_0 : i32, i32
  }
  func.func @transform_7(%arg0: i32) -> (i32, i32) {
    %c0_i32 = arith.constant 0 : i32
    %c0_i32_0 = arith.constant 0 : i32
    %c0_i32_1 = arith.constant 0 : i32
    return %c0_i32, %c0_i32_0 : i32, i32
  }
  func.func @transform_8(%arg0: i32) -> (i32, i32) {
    %c0_i32 = arith.constant 0 : i32
    %c0_i32_0 = arith.constant 0 : i32
    %c0_i32_1 = arith.constant 0 : i32
    return %c0_i32, %c0_i32_0 : i32, i32
  }
  func.func @transform_9(%arg0: i32) -> (i32, i32) {
    %c0_i32 = arith.constant 0 : i32
    %c0_i32_0 = arith.constant 0 : i32
    %c0_i32_1 = arith.constant 0 : i32
    return %c0_i32, %c0_i32_0 : i32, i32
  }
  func.func @transform_10(%arg0: i32) -> (i32, i32) {
    %c0_i32 = arith.constant 0 : i32
    %c0_i32_0 = arith.constant 0 : i32
    %c0_i32_1 = arith.constant 0 : i32
    return %c0_i32, %c0_i32_0 : i32, i32
  }
  func.func @transform_11(%arg0: i32) -> (i32, i32) {
    %c0_i32 = arith.constant 0 : i32
    %c0_i32_0 = arith.constant 0 : i32
    %c0_i32_1 = arith.constant 0 : i32
    return %c0_i32, %c0_i32_0 : i32, i32
  }
  func.func @transform_12(%arg0: i32) -> (i32, i32) {
    %c0_i32 = arith.constant 0 : i32
    %c0_i32_0 = arith.constant 0 : i32
    %c0_i32_1 = arith.constant 0 : i32
    return %c0_i32, %c0_i32_0 : i32, i32
  }
  func.func @transform_13(%arg0: i32) -> (i32, i32) {
    %c0_i32 = arith.constant 0 : i32
    %c0_i32_0 = arith.constant 0 : i32
    %c0_i32_1 = arith.constant 0 : i32
    return %c0_i32, %c0_i32_0 : i32, i32
  }
  func.func @transform_14(%arg0: i32) -> (i32, i32) {
    %c0_i32 = arith.constant 0 : i32
    %c0_i32_0 = arith.constant 0 : i32
    %c0_i32_1 = arith.constant 0 : i32
    return %c0_i32, %c0_i32_0 : i32, i32
  }
  func.func @transform_15(%arg0: i32) -> (i32, i32) {
    %c0_i32 = arith.constant 0 : i32
    %c0_i32_0 = arith.constant 0 : i32
    %c0_i32_1 = arith.constant 0 : i32
    return %c0_i32, %c0_i32_0 : i32, i32
  }
  func.func @transform_16(%arg0: i32) -> (i32, i32) {
    %c0_i32 = arith.constant 0 : i32
    %c0_i32_0 = arith.constant 0 : i32
    %c0_i32_1 = arith.constant 0 : i32
    return %c0_i32, %c0_i32_0 : i32, i32
  }
  func.func @transform_17(%arg0: i32) -> (i32, i32) {
    %c0_i32 = arith.constant 0 : i32
    %c0_i32_0 = arith.constant 0 : i32
    %c0_i32_1 = arith.constant 0 : i32
    return %c0_i32, %c0_i32_0 : i32, i32
  }
  func.func @transform_18(%arg0: i32) -> (i32, i32) {
    %c0_i32 = arith.constant 0 : i32
    %c0_i32_0 = arith.constant 0 : i32
    %c0_i32_1 = arith.constant 0 : i32
    return %c0_i32, %c0_i32_0 : i32, i32
  }
  func.func @transform_19(%arg0: i32) -> (i32, i32) {
    %c0_i32 = arith.constant 0 : i32
    %c0_i32_0 = arith.constant 0 : i32
    %c0_i32_1 = arith.constant 0 : i32
    return %c0_i32, %c0_i32_0 : i32, i32
  }
  func.func @transform_20(%arg0: i32) -> (i32, i32) {
    %c0_i32 = arith.constant 0 : i32
    %c0_i32_0 = arith.constant 0 : i32
    %c0_i32_1 = arith.constant 0 : i32
    return %c0_i32, %c0_i32_0 : i32, i32
  }
  func.func @transform_21(%arg0: i32) -> (i32, i32) {
    %c0_i32 = arith.constant 0 : i32
    %c0_i32_0 = arith.constant 0 : i32
    %c0_i32_1 = arith.constant 0 : i32
    return %c0_i32, %c0_i32_0 : i32, i32
  }
  func.func @transform_22(%arg0: i32) -> (i32, i32) {
    %c0_i32 = arith.constant 0 : i32
    %c0_i32_0 = arith.constant 0 : i32
    %c0_i32_1 = arith.constant 0 : i32
    return %c0_i32, %c0_i32_0 : i32, i32
  }
  func.func @transform_23(%arg0: i32) -> (i32, i32) {
    %c0_i32 = arith.constant 0 : i32
    %c0_i32_0 = arith.constant 0 : i32
    %c0_i32_1 = arith.constant 0 : i32
    return %c0_i32, %c0_i32_0 : i32, i32
  }
  func.func @transform_24(%arg0: i32) -> (i32, i32) {
    %c0_i32 = arith.constant 0 : i32
    %c0_i32_0 = arith.constant 0 : i32
    %c0_i32_1 = arith.constant 0 : i32
    return %c0_i32, %c0_i32_0 : i32, i32
  }
  func.func @transform_25(%arg0: i32) -> (i32, i32) {
    %c0_i32 = arith.constant 0 : i32
    %c0_i32_0 = arith.constant 0 : i32
    %c0_i32_1 = arith.constant 0 : i32
    return %c0_i32, %c0_i32_0 : i32, i32
  }
  func.func @transform_26(%arg0: i32) -> (i32, i32) {
    %c0_i32 = arith.constant 0 : i32
    %c0_i32_0 = arith.constant 0 : i32
    %c0_i32_1 = arith.constant 0 : i32
    return %c0_i32, %c0_i32_0 : i32, i32
  }
  func.func @transform_27(%arg0: i32) -> (i32, i32, i32) {
    %c0_i32 = arith.constant 0 : i32
    %c0_i32_0 = arith.constant 0 : i32
    %c0_i32_1 = arith.constant 0 : i32
    return %arg0, %c0_i32, %c0_i32_0 : i32, i32, i32
  }
  func.func @transform_28(%arg0: i32) -> (i32, i32, i32) {
    %c0_i32 = arith.constant 0 : i32
    %c0_i32_0 = arith.constant 0 : i32
    %c0_i32_1 = arith.constant 0 : i32
    return %arg0, %c0_i32, %c0_i32_0 : i32, i32, i32
  }
}

</mosaic_0001>

<llo_original>
// kernel: _lambda_.1
$region0: #{_lambda_.1}
  #allocation0 [shape = 'u32[]', space=smem, size = 0x4, offset = 0x4, fixed_abs, tag = 'smem constant byte address 0x4 - core index']
  #allocation1 [shape = 'u32[72,128]{1,0:T(1,128)}', space=vmem, size = 0x9000, scoped, tag = 'internal scratch']
  %s0 = inlined_call_operand.vmem [shape: f32[2,3,16], index: 0, kind: input, shape index: {}]
  %s1 = inlined_call_operand.vmem [shape: f32[2,8,16], index: 1, kind: input, shape index: {}]
  %s2 = inlined_call_operand.vmem [shape: f32[8,3], index: 2, kind: input, shape index: {}]
  %s3 = inlined_call_operand.vmem [shape: f32[8,1], index: 3, kind: input, shape index: {}]
  %s4 = inlined_call_operand.vmem [shape: f32[32,8], index: 4, kind: input, shape index: {}]
  %s5 = inlined_call_operand.vmem [shape: f32[32,1], index: 5, kind: input, shape index: {}]
  %s6 = inlined_call_operand.vmem [shape: f32[40,16], index: 6, kind: input, shape index: {}]
  %s7 = inlined_call_operand.vmem [shape: f32[1,16], index: 7, kind: input, shape index: {}]
  %s8 = inlined_call_operand.vmem [shape: f32[1,16], index: 8, kind: input, shape index: {}]
  %s9 = inlined_call_operand.vmem [shape: f32[16,24], index: 9, kind: input, shape index: {}]
  %s10 = inlined_call_operand.vmem [shape: f32[1,24], index: 10, kind: input, shape index: {}]
  %s11 = inlined_call_operand.vmem [shape: f32[8,16], index: 11, kind: input, shape index: {}]
  %s12 = inlined_call_operand.vmem [shape: f32[1,16], index: 12, kind: input, shape index: {}]
  %s13 = inlined_call_operand.vmem [shape: f32[1,16], index: 13, kind: input, shape index: {}]
  %s14 = inlined_call_operand.vmem [shape: f32[1,16], index: 14, kind: input, shape index: {}]
  %s15 = inlined_call_operand.vmem [shape: f32[16,64], index: 15, kind: input, shape index: {}]
  %s16 = inlined_call_operand.vmem [shape: f32[1,64], index: 16, kind: input, shape index: {}]
  %s17 = inlined_call_operand.vmem [shape: f32[64,16], index: 17, kind: input, shape index: {}]
  %s18 = inlined_call_operand.vmem [shape: f32[1,16], index: 18, kind: input, shape index: {}]
  %s19 = inlined_call_operand.vmem [shape: f32[1,16], index: 19, kind: input, shape index: {}]
  %s20 = inlined_call_operand.vmem [shape: f32[1,16], index: 20, kind: input, shape index: {}]
  %s21 = inlined_call_operand.vmem [shape: f32[64,16], index: 21, kind: input, shape index: {}]
  %s22 = inlined_call_operand.vmem [shape: f32[64,1], index: 22, kind: input, shape index: {}]
  %s23 = inlined_call_operand.vmem [shape: f32[1,40], index: 23, kind: input, shape index: {}]
  %s24 = inlined_call_operand.vmem [shape: f32[1,40], index: 24, kind: input, shape index: {}]
  %s25 = inlined_call_operand.vmem [shape: f32[40,24], index: 25, kind: input, shape index: {}]
  %s26 = inlined_call_operand.vmem [shape: f32[1,24], index: 26, kind: input, shape index: {}]
  %s27 = inlined_call_operand.hbm [shape: s32[2,1,16], index: 27, kind: output, shape index: {0}]
  %s28 = inlined_call_operand.vmem [shape: f32[2,64,24], index: 28, kind: output, shape index: {1}]
  %29 = xla_tuple %s27, %s28
  %s30 = sld [smem:[#allocation0]]
  $region149: #{_lambda_.1} parent=0
    _
  %s32 = ssub.s32 1, %s30
  %s33 = scalar_select 0, %s32, %s30
  $region1: #{_lambda_.1} parent=0
    #allocation2 [shape = 'u8[1024]{0}', space=vmem, size = 0x400, scoped, tag = 'output window, operand 0']
    #allocation3 [shape = 's32[2]{0}', space=sflag, size = 0x8, scoped, tag = 'scoped memory for _lambda_.1']
    %34 = vsyncpa [#allocation3], 0
    %s35 = scalar_lea.sflag [#allocation3], 1
    %36 = vsyncpa %s35, 0
    loop: start=0, step=1, limit=4
    $region2: #{_lambda_.1} parent=1 // loop_pre_header
      _
    $region3: #{_lambda_.1} parent=1 // loop_header
      %s38 = sphi 0, %s42
      %p39 = scmp.ge.s32.totalorder %s38, 4
      %s48 = sphi 0, %s50
      %s51 = sphi 0, %s48
      %s52 = sphi 0, %s51
      %s68 = sphi 0, %s52
      %s74 = sphi 0, %s76
      %s77 = sphi 0, %s74
      %s78 = sphi 0, %s77
      %s94 = sphi 0, %s78
      %s98 = sphi 0, %s98
      %s100 = sphi 0, %s98
      %s101 = sphi 0, %s100
      %s115 = sphi 0, %s101
      %s119 = sphi 0, %s119
      %s121 = sphi 0, %s119
      %s122 = sphi 0, %s121
      %s136 = sphi 0, %s122
      %s140 = sphi 0, %s140
      %s142 = sphi 0, %s140
      %s143 = sphi 0, %s142
      %s157 = sphi 0, %s143
      %s161 = sphi 0, %s161
      %s163 = sphi 0, %s161
      %s164 = sphi 0, %s163
      %s178 = sphi 0, %s164
      %s182 = sphi 0, %s182
      %s184 = sphi 0, %s182
      %s185 = sphi 0, %s184
      %s199 = sphi 0, %s185
      %s203 = sphi 0, %s203
      %s205 = sphi 0, %s203
      %s206 = sphi 0, %s205
      %s220 = sphi 0, %s206
      %s224 = sphi 0, %s224
      %s226 = sphi 0, %s224
      %s227 = sphi 0, %s226
      %s241 = sphi 0, %s227
      %s245 = sphi 0, %s245
      %s247 = sphi 0, %s245
      %s248 = sphi 0, %s247
      %s262 = sphi 0, %s248
      %s266 = sphi 0, %s266
      %s268 = sphi 0, %s266
      %s269 = sphi 0, %s268
      %s283 = sphi 0, %s269
      %s287 = sphi 0, %s287
      %s289 = sphi 0, %s287
      %s290 = sphi 0, %s289
      %s304 = sphi 0, %s290
      %s308 = sphi 0, %s308
      %s310 = sphi 0, %s308
      %s311 = sphi 0, %s310
      %s325 = sphi 0, %s311
      %s329 = sphi 0, %s329
      %s331 = sphi 0, %s329
      %s332 = sphi 0, %s331
      %s346 = sphi 0, %s332
      %s350 = sphi 0, %s350
      %s352 = sphi 0, %s350
      %s353 = sphi 0, %s352
      %s367 = sphi 0, %s353
      %s371 = sphi 0, %s371
      %s373 = sphi 0, %s371
      %s374 = sphi 0, %s373
      %s388 = sphi 0, %s374
      %s392 = sphi 0, %s392
      %s394 = sphi 0, %s392
      %s395 = sphi 0, %s394
      %s409 = sphi 0, %s395
      %s413 = sphi 0, %s413
      %s415 = sphi 0, %s413
      %s416 = sphi 0, %s415
      %s430 = sphi 0, %s416
      %s434 = sphi 0, %s434
      %s436 = sphi 0, %s434
      %s437 = sphi 0, %s436
      %s451 = sphi 0, %s437
      %s455 = sphi 0, %s455
      %s457 = sphi 0, %s455
      %s458 = sphi 0, %s457
      %s472 = sphi 0, %s458
      %s476 = sphi 0, %s476
      %s478 = sphi 0, %s476
      %s479 = sphi 0, %s478
      %s493 = sphi 0, %s479
      %s497 = sphi 0, %s497
      %s499 = sphi 0, %s497
      %s500 = sphi 0, %s499
      %s514 = sphi 0, %s500
      %s518 = sphi 0, %s518
      %s520 = sphi 0, %s518
      %s521 = sphi 0, %s520
      %s535 = sphi 0, %s521
      %s539 = sphi 0, %s539
      %s541 = sphi 0, %s539
      %s542 = sphi 0, %s541
      %s556 = sphi 0, %s542
      %s560 = sphi 0, %s560
      %s562 = sphi 0, %s560
      %s563 = sphi 0, %s562
      %s577 = sphi 0, %s563
      %s581 = sphi 0, %s581
      %s583 = sphi 0, %s581
      %s584 = sphi 0, %s583
      %s598 = sphi 0, %s584
      %s602 = sphi 0, %s602
      %s604 = sphi 0, %s602
      %s605 = sphi 0, %s604
      %s619 = sphi 0, %s605
      %s625 = sphi 0, %s627
      %s628 = sphi 0, %s625
      %s629 = sphi 0, %s628
      %s645 = sphi 0, %s629
      %s651 = sphi 0, %s653
      %s654 = sphi 0, %s651
      %s655 = sphi 0, %s654
      %s671 = sphi 0, %s655
    $region4: #{_lambda_.1} parent=1 // loop_header_branch
      %41 = sbr.rel (%p39) target = $region8
    $region5: #{_lambda_.1} parent=1 // loop_body
      %s43 = ssub.s32 %s38, 1
      %s44 = ssub.s32 %s38, 2
      %s45 = sadd.s32 %s38, 1
      %s46 = ssub.s32 %s38, %s45
      %p47 = scmp.eq.s32.totalorder %s46, 0
      %s49 = sadd.s32 %s48, 1
      %s50 = scalar_select %p47, %s48, %s49
      %p53 = pneg %p47
      %p54 = scmp.eq.s32.totalorder %s38, 1
      %p55 = por %p53, %p54
      %p56 = scmp.ne.s32.totalorder %s48, %s51
      %p57 = scmp.eq.s32.totalorder %s38, 0
      %p58 = por %p56, %p57
      %p59 = scmp.ne.s32.totalorder %s48, %s51
      %p60 = scmp.eq.s32.totalorder %s43, 1
      %p61 = por %p59, %p60
      %p62 = scmp.ne.s32.totalorder %s51, %s52
      %p63 = scmp.eq.s32.totalorder %s43, 0
      %p64 = por %p62, %p63
      %p65 = scmp.ne.s32.totalorder %s51, %s52
      %p66 = scmp.eq.s32.totalorder %s44, 1
      %p67 = por %p65, %p66
      %p69 = scmp.ne.s32.totalorder %s52, %s68
      %p70 = scmp.eq.s32.totalorder %s44, 0
      %p71 = por %p69, %p70
      %s72 = ssub.s32 %s38, %s45
      %p73 = scmp.eq.s32.totalorder %s72, 0
      %s75 = sadd.s32 %s74, 1
      %s76 = scalar_select %p73, %s74, %s75
      %p79 = pneg %p73
      %p80 = scmp.eq.s32.totalorder %s38, 1
      %p81 = por %p79, %p80
      %p82 = scmp.ne.s32.totalorder %s74, %s77
      %p83 = scmp.eq.s32.totalorder %s38, 0
      %p84 = por %p82, %p83
      %p85 = scmp.ne.s32.totalorder %s74, %s77
      %p86 = scmp.eq.s32.totalorder %s43, 1
      %p87 = por %p85, %p86
      %p88 = scmp.ne.s32.totalorder %s77, %s78
      %p89 = scmp.eq.s32.totalorder %s43, 0
      %p90 = por %p88, %p89
      %p91 = scmp.ne.s32.totalorder %s77, %s78
      %p92 = scmp.eq.s32.totalorder %s44, 1
      %p93 = por %p91, %p92
      %p95 = scmp.ne.s32.totalorder %s78, %s94
      %p96 = scmp.eq.s32.totalorder %s44, 0
      %p97 = por %p95, %p96
      %s99 = sadd.s32 %s98, 1
      %p102 = scmp.eq.s32.totalorder %s38, 1
      %p103 = scmp.ne.s32.totalorder %s98, %s100
      %p104 = scmp.eq.s32.totalorder %s38, 0
      %p105 = por %p103, %p104
      %p106 = scmp.ne.s32.totalorder %s98, %s100
      %p107 = scmp.eq.s32.totalorder %s43, 1
      %p108 = por %p106, %p107
      %p109 = scmp.ne.s32.totalorder %s100, %s101
      %p110 = scmp.eq.s32.totalorder %s43, 0
      %p111 = por %p109, %p110
      %p112 = scmp.ne.s32.totalorder %s100, %s101
      %p113 = scmp.eq.s32.totalorder %s44, 1
      %p114 = por %p112, %p113
      %p116 = scmp.ne.s32.totalorder %s101, %s115
      %p117 = scmp.eq.s32.totalorder %s44, 0
      %p118 = por %p116, %p117
      %s120 = sadd.s32 %s119, 1
      %p123 = scmp.eq.s32.totalorder %s38, 1
      %p124 = scmp.ne.s32.totalorder %s119, %s121
      %p125 = scmp.eq.s32.totalorder %s38, 0
      %p126 = por %p124, %p125
      %p127 = scmp.ne.s32.totalorder %s119, %s121
      %p128 = scmp.eq.s32.totalorder %s43, 1
      %p129 = por %p127, %p128
      %p130 = scmp.ne.s32.totalorder %s121, %s122
      %p131 = scmp.eq.s32.totalorder %s43, 0
      %p132 = por %p130, %p131
      %p133 = scmp.ne.s32.totalorder %s121, %s122
      %p134 = scmp.eq.s32.totalorder %s44, 1
      %p135 = por %p133, %p134
      %p137 = scmp.ne.s32.totalorder %s122, %s136
      %p138 = scmp.eq.s32.totalorder %s44, 0
      %p139 = por %p137, %p138
      %s141 = sadd.s32 %s140, 1
      %p144 = scmp.eq.s32.totalorder %s38, 1
      %p145 = scmp.ne.s32.totalorder %s140, %s142
      %p146 = scmp.eq.s32.totalorder %s38, 0
      %p147 = por %p145, %p146
      %p148 = scmp.ne.s32.totalorder %s140, %s142
      %p149 = scmp.eq.s32.totalorder %s43, 1
      %p150 = por %p148, %p149
      %p151 = scmp.ne.s32.totalorder %s142, %s143
      %p152 = scmp.eq.s32.totalorder %s43, 0
      %p153 = por %p151, %p152
      %p154 = scmp.ne.s32.totalorder %s142, %s143
      %p155 = scmp.eq.s32.totalorder %s44, 1
      %p156 = por %p154, %p155
      %p158 = scmp.ne.s32.totalorder %s143, %s157
      %p159 = scmp.eq.s32.totalorder %s44, 0
      %p160 = por %p158, %p159
      %s162 = sadd.s32 %s161, 1
      %p165 = scmp.eq.s32.totalorder %s38, 1
      %p166 = scmp.ne.s32.totalorder %s161, %s163
      %p167 = scmp.eq.s32.totalorder %s38, 0
      %p168 = por %p166, %p167
      %p169 = scmp.ne.s32.totalorder %s161, %s163
      %p170 = scmp.eq.s32.totalorder %s43, 1
      %p171 = por %p169, %p170
      %p172 = scmp.ne.s32.totalorder %s163, %s164
      %p173 = scmp.eq.s32.totalorder %s43, 0
      %p174 = por %p172, %p173
      %p175 = scmp.ne.s32.totalorder %s163, %s164
      %p176 = scmp.eq.s32.totalorder %s44, 1
      %p177 = por %p175, %p176
      %p179 = scmp.ne.s32.totalorder %s164, %s178
      %p180 = scmp.eq.s32.totalorder %s44, 0
      %p181 = por %p179, %p180
      %s183 = sadd.s32 %s182, 1
      %p186 = scmp.eq.s32.totalorder %s38, 1
      %p187 = scmp.ne.s32.totalorder %s182, %s184
      %p188 = scmp.eq.s32.totalorder %s38, 0
      %p189 = por %p187, %p188
      %p190 = scmp.ne.s32.totalorder %s182, %s184
      %p191 = scmp.eq.s32.totalorder %s43, 1
      %p192 = por %p190, %p191
      %p193 = scmp.ne.s32.totalorder %s184, %s185
      %p194 = scmp.eq.s32.totalorder %s43, 0
      %p195 = por %p193, %p194
      %p196 = scmp.ne.s32.totalorder %s184, %s185
      %p197 = scmp.eq.s32.totalorder %s44, 1
      %p198 = por %p196, %p197
      %p200 = scmp.ne.s32.totalorder %s185, %s199
      %p201 = scmp.eq.s32.totalorder %s44, 0
      %p202 = por %p200, %p201
      %s204 = sadd.s32 %s203, 1
      %p207 = scmp.eq.s32.totalorder %s38, 1
      %p208 = scmp.ne.s32.totalorder %s203, %s205
      %p209 = scmp.eq.s32.totalorder %s38, 0
      %p210 = por %p208, %p209
      %p211 = scmp.ne.s32.totalorder %s203, %s205
      %p212 = scmp.eq.s32.totalorder %s43, 1
      %p213 = por %p211, %p212
      %p214 = scmp.ne.s32.totalorder %s205, %s206
      %p215 = scmp.eq.s32.totalorder %s43, 0
      %p216 = por %p214, %p215
      %p217 = scmp.ne.s32.totalorder %s205, %s206
      %p218 = scmp.eq.s32.totalorder %s44, 1
      %p219 = por %p217, %p218
      %p221 = scmp.ne.s32.totalorder %s206, %s220
      %p222 = scmp.eq.s32.totalorder %s44, 0
      %p223 = por %p221, %p222
      %s225 = sadd.s32 %s224, 1
      %p228 = scmp.eq.s32.totalorder %s38, 1
      %p229 = scmp.ne.s32.totalorder %s224, %s226
      %p230 = scmp.eq.s32.totalorder %s38, 0
      %p231 = por %p229, %p230
      %p232 = scmp.ne.s32.totalorder %s224, %s226
      %p233 = scmp.eq.s32.totalorder %s43, 1
      %p234 = por %p232, %p233
      %p235 = scmp.ne.s32.totalorder %s226, %s227
      %p236 = scmp.eq.s32.totalorder %s43, 0
      %p237 = por %p235, %p236
      %p238 = scmp.ne.s32.totalorder %s226, %s227
      %p239 = scmp.eq.s32.totalorder %s44, 1
      %p240 = por %p238, %p239
      %p242 = scmp.ne.s32.totalorder %s227, %s241
      %p243 = scmp.eq.s32.totalorder %s44, 0
      %p244 = por %p242, %p243
      %s246 = sadd.s32 %s245, 1
      %p249 = scmp.eq.s32.totalorder %s38, 1
      %p250 = scmp.ne.s32.totalorder %s245, %s247
      %p251 = scmp.eq.s32.totalorder %s38, 0
      %p252 = por %p250, %p251
      %p253 = scmp.ne.s32.totalorder %s245, %s247
      %p254 = scmp.eq.s32.totalorder %s43, 1
      %p255 = por %p253, %p254
      %p256 = scmp.ne.s32.totalorder %s247, %s248
      %p257 = scmp.eq.s32.totalorder %s43, 0
      %p258 = por %p256, %p257
      %p259 = scmp.ne.s32.totalorder %s247, %s248
      %p260 = scmp.eq.s32.totalorder %s44, 1
      %p261 = por %p259, %p260
      %p263 = scmp.ne.s32.totalorder %s248, %s262
      %p264 = scmp.eq.s32.totalorder %s44, 0
      %p265 = por %p263, %p264
      %s267 = sadd.s32 %s266, 1
      %p270 = scmp.eq.s32.totalorder %s38, 1
      %p271 = scmp.ne.s32.totalorder %s266, %s268
      %p272 = scmp.eq.s32.totalorder %s38, 0
      %p273 = por %p271, %p272
      %p274 = scmp.ne.s32.totalorder %s266, %s268
      %p275 = scmp.eq.s32.totalorder %s43, 1
      %p276 = por %p274, %p275
      %p277 = scmp.ne.s32.totalorder %s268, %s269
      %p278 = scmp.eq.s32.totalorder %s43, 0
      %p279 = por %p277, %p278
      %p280 = scmp.ne.s32.totalorder %s268, %s269
      %p281 = scmp.eq.s32.totalorder %s44, 1
      %p282 = por %p280, %p281
      %p284 = scmp.ne.s32.totalorder %s269, %s283
      %p285 = scmp.eq.s32.totalorder %s44, 0
      %p286 = por %p284, %p285
      %s288 = sadd.s32 %s287, 1
      %p291 = scmp.eq.s32.totalorder %s38, 1
      %p292 = scmp.ne.s32.totalorder %s287, %s289
      %p293 = scmp.eq.s32.totalorder %s38, 0
      %p294 = por %p292, %p293
      %p295 = scmp.ne.s32.totalorder %s287, %s289
      %p296 = scmp.eq.s32.totalorder %s43, 1
      %p297 = por %p295, %p296
      %p298 = scmp.ne.s32.totalorder %s289, %s290
      %p299 = scmp.eq.s32.totalorder %s43, 0
      %p300 = por %p298, %p299
      %p301 = scmp.ne.s32.totalorder %s289, %s290
      %p302 = scmp.eq.s32.totalorder %s44, 1
      %p303 = por %p301, %p302
      %p305 = scmp.ne.s32.totalorder %s290, %s304
      %p306 = scmp.eq.s32.totalorder %s44, 0
      %p307 = por %p305, %p306
      %s309 = sadd.s32 %s308, 1
      %p312 = scmp.eq.s32.totalorder %s38, 1
      %p313 = scmp.ne.s32.totalorder %s308, %s310
      %p314 = scmp.eq.s32.totalorder %s38, 0
      %p315 = por %p313, %p314
      %p316 = scmp.ne.s32.totalorder %s308, %s310
      %p317 = scmp.eq.s32.totalorder %s43, 1
      %p318 = por %p316, %p317
      %p319 = scmp.ne.s32.totalorder %s310, %s311
      %p320 = scmp.eq.s32.totalorder %s43, 0
      %p321 = por %p319, %p320
      %p322 = scmp.ne.s32.totalorder %s310, %s311
      %p323 = scmp.eq.s32.totalorder %s44, 1
      %p324 = por %p322, %p323
      %p326 = scmp.ne.s32.totalorder %s311, %s325
      %p327 = scmp.eq.s32.totalorder %s44, 0
      %p328 = por %p326, %p327
      %s330 = sadd.s32 %s329, 1
      %p333 = scmp.eq.s32.totalorder %s38, 1
      %p334 = scmp.ne.s32.totalorder %s329, %s331
      %p335 = scmp.eq.s32.totalorder %s38, 0
      %p336 = por %p334, %p335
      %p337 = scmp.ne.s32.totalorder %s329, %s331
      %p338 = scmp.eq.s32.totalorder %s43, 1
      %p339 = por %p337, %p338
      %p340 = scmp.ne.s32.totalorder %s331, %s332
      %p341 = scmp.eq.s32.totalorder %s43, 0
      %p342 = por %p340, %p341
      %p343 = scmp.ne.s32.totalorder %s331, %s332
      %p344 = scmp.eq.s32.totalorder %s44, 1
      %p345 = por %p343, %p344
      %p347 = scmp.ne.s32.totalorder %s332, %s346
      %p348 = scmp.eq.s32.totalorder %s44, 0
      %p349 = por %p347, %p348
      %s351 = sadd.s32 %s350, 1
      %p354 = scmp.eq.s32.totalorder %s38, 1
      %p355 = scmp.ne.s32.totalorder %s350, %s352
      %p356 = scmp.eq.s32.totalorder %s38, 0
      %p357 = por %p355, %p356
      %p358 = scmp.ne.s32.totalorder %s350, %s352
      %p359 = scmp.eq.s32.totalorder %s43, 1
      %p360 = por %p358, %p359
      %p361 = scmp.ne.s32.totalorder %s352, %s353
      %p362 = scmp.eq.s32.totalorder %s43, 0
      %p363 = por %p361, %p362
      %p364 = scmp.ne.s32.totalorder %s352, %s353
      %p365 = scmp.eq.s32.totalorder %s44, 1
      %p366 = por %p364, %p365
      %p368 = scmp.ne.s32.totalorder %s353, %s367
      %p369 = scmp.eq.s32.totalorder %s44, 0
      %p370 = por %p368, %p369
      %s372 = sadd.s32 %s371, 1
      %p375 = scmp.eq.s32.totalorder %s38, 1
      %p376 = scmp.ne.s32.totalorder %s371, %s373
      %p377 = scmp.eq.s32.totalorder %s38, 0
      %p378 = por %p376, %p377
      %p379 = scmp.ne.s32.totalorder %s371, %s373
      %p380 = scmp.eq.s32.totalorder %s43, 1
      %p381 = por %p379, %p380
      %p382 = scmp.ne.s32.totalorder %s373, %s374
      %p383 = scmp.eq.s32.totalorder %s43, 0
      %p384 = por %p382, %p383
      %p385 = scmp.ne.s32.totalorder %s373, %s374
      %p386 = scmp.eq.s32.totalorder %s44, 1
      %p387 = por %p385, %p386
      %p389 = scmp.ne.s32.totalorder %s374, %s388
      %p390 = scmp.eq.s32.totalorder %s44, 0
      %p391 = por %p389, %p390
      %s393 = sadd.s32 %s392, 1
      %p396 = scmp.eq.s32.totalorder %s38, 1
      %p397 = scmp.ne.s32.totalorder %s392, %s394
      %p398 = scmp.eq.s32.totalorder %s38, 0
      %p399 = por %p397, %p398
      %p400 = scmp.ne.s32.totalorder %s392, %s394
      %p401 = scmp.eq.s32.totalorder %s43, 1
      %p402 = por %p400, %p401
      %p403 = scmp.ne.s32.totalorder %s394, %s395
      %p404 = scmp.eq.s32.totalorder %s43, 0
      %p405 = por %p403, %p404
      %p406 = scmp.ne.s32.totalorder %s394, %s395
      %p407 = scmp.eq.s32.totalorder %s44, 1
      %p408 = por %p406, %p407
      %p410 = scmp.ne.s32.totalorder %s395, %s409
      %p411 = scmp.eq.s32.totalorder %s44, 0
      %p412 = por %p410, %p411
      %s414 = sadd.s32 %s413, 1
      %p417 = scmp.eq.s32.totalorder %s38, 1
      %p418 = scmp.ne.s32.totalorder %s413, %s415
      %p419 = scmp.eq.s32.totalorder %s38, 0
      %p420 = por %p418, %p419
      %p421 = scmp.ne.s32.totalorder %s413, %s415
      %p422 = scmp.eq.s32.totalorder %s43, 1
      %p423 = por %p421, %p422
      %p424 = scmp.ne.s32.totalorder %s415, %s416
      %p425 = scmp.eq.s32.totalorder %s43, 0
      %p426 = por %p424, %p425
      %p427 = scmp.ne.s32.totalorder %s415, %s416
      %p428 = scmp.eq.s32.totalorder %s44, 1
      %p429 = por %p427, %p428
      %p431 = scmp.ne.s32.totalorder %s416, %s430
      %p432 = scmp.eq.s32.totalorder %s44, 0
      %p433 = por %p431, %p432
      %s435 = sadd.s32 %s434, 1
      %p438 = scmp.eq.s32.totalorder %s38, 1
      %p439 = scmp.ne.s32.totalorder %s434, %s436
      %p440 = scmp.eq.s32.totalorder %s38, 0
      %p441 = por %p439, %p440
      %p442 = scmp.ne.s32.totalorder %s434, %s436
      %p443 = scmp.eq.s32.totalorder %s43, 1
      %p444 = por %p442, %p443
      %p445 = scmp.ne.s32.totalorder %s436, %s437
      %p446 = scmp.eq.s32.totalorder %s43, 0
      %p447 = por %p445, %p446
      %p448 = scmp.ne.s32.totalorder %s436, %s437
      %p449 = scmp.eq.s32.totalorder %s44, 1
      %p450 = por %p448, %p449
      %p452 = scmp.ne.s32.totalorder %s437, %s451
      %p453 = scmp.eq.s32.totalorder %s44, 0
      %p454 = por %p452, %p453
      %s456 = sadd.s32 %s455, 1
      %p459 = scmp.eq.s32.totalorder %s38, 1
      %p460 = scmp.ne.s32.totalorder %s455, %s457
      %p461 = scmp.eq.s32.totalorder %s38, 0
      %p462 = por %p460, %p461
      %p463 = scmp.ne.s32.totalorder %s455, %s457
      %p464 = scmp.eq.s32.totalorder %s43, 1
      %p465 = por %p463, %p464
      %p466 = scmp.ne.s32.totalorder %s457, %s458
      %p467 = scmp.eq.s32.totalorder %s43, 0
      %p468 = por %p466, %p467
      %p469 = scmp.ne.s32.totalorder %s457, %s458
      %p470 = scmp.eq.s32.totalorder %s44, 1
      %p471 = por %p469, %p470
      %p473 = scmp.ne.s32.totalorder %s458, %s472
      %p474 = scmp.eq.s32.totalorder %s44, 0
      %p475 = por %p473, %p474
      %s477 = sadd.s32 %s476, 1
      %p480 = scmp.eq.s32.totalorder %s38, 1
      %p481 = scmp.ne.s32.totalorder %s476, %s478
      %p482 = scmp.eq.s32.totalorder %s38, 0
      %p483 = por %p481, %p482
      %p484 = scmp.ne.s32.totalorder %s476, %s478
      %p485 = scmp.eq.s32.totalorder %s43, 1
      %p486 = por %p484, %p485
      %p487 = scmp.ne.s32.totalorder %s478, %s479
      %p488 = scmp.eq.s32.totalorder %s43, 0
      %p489 = por %p487, %p488
      %p490 = scmp.ne.s32.totalorder %s478, %s479
      %p491 = scmp.eq.s32.totalorder %s44, 1
      %p492 = por %p490, %p491
      %p494 = scmp.ne.s32.totalorder %s479, %s493
      %p495 = scmp.eq.s32.totalorder %s44, 0
      %p496 = por %p494, %p495
      %s498 = sadd.s32 %s497, 1
      %p501 = scmp.eq.s32.totalorder %s38, 1
      %p502 = scmp.ne.s32.totalorder %s497, %s499
      %p503 = scmp.eq.s32.totalorder %s38, 0
      %p504 = por %p502, %p503
      %p505 = scmp.ne.s32.totalorder %s497, %s499
      %p506 = scmp.eq.s32.totalorder %s43, 1
      %p507 = por %p505, %p506
      %p508 = scmp.ne.s32.totalorder %s499, %s500
      %p509 = scmp.eq.s32.totalorder %s43, 0
      %p510 = por %p508, %p509
      %p511 = scmp.ne.s32.totalorder %s499, %s500
      %p512 = scmp.eq.s32.totalorder %s44, 1
      %p513 = por %p511, %p512
      %p515 = scmp.ne.s32.totalorder %s500, %s514
      %p516 = scmp.eq.s32.totalorder %s44, 0
      %p517 = por %p515, %p516
      %s519 = sadd.s32 %s518, 1
      %p522 = scmp.eq.s32.totalorder %s38, 1
      %p523 = scmp.ne.s32.totalorder %s518, %s520
      %p524 = scmp.eq.s32.totalorder %s38, 0
      %p525 = por %p523, %p524
      %p526 = scmp.ne.s32.totalorder %s518, %s520
      %p527 = scmp.eq.s32.totalorder %s43, 1
      %p528 = por %p526, %p527
      %p529 = scmp.ne.s32.totalorder %s520, %s521
      %p530 = scmp.eq.s32.totalorder %s43, 0
      %p531 = por %p529, %p530
      %p532 = scmp.ne.s32.totalorder %s520, %s521
      %p533 = scmp.eq.s32.totalorder %s44, 1
      %p534 = por %p532, %p533
      %p536 = scmp.ne.s32.totalorder %s521, %s535
      %p537 = scmp.eq.s32.totalorder %s44, 0
      %p538 = por %p536, %p537
      %s540 = sadd.s32 %s539, 1
      %p543 = scmp.eq.s32.totalorder %s38, 1
      %p544 = scmp.ne.s32.totalorder %s539, %s541
      %p545 = scmp.eq.s32.totalorder %s38, 0
      %p546 = por %p544, %p545
      %p547 = scmp.ne.s32.totalorder %s539, %s541
      %p548 = scmp.eq.s32.totalorder %s43, 1
      %p549 = por %p547, %p548
      %p550 = scmp.ne.s32.totalorder %s541, %s542
      %p551 = scmp.eq.s32.totalorder %s43, 0
      %p552 = por %p550, %p551
      %p553 = scmp.ne.s32.totalorder %s541, %s542
      %p554 = scmp.eq.s32.totalorder %s44, 1
      %p555 = por %p553, %p554
      %p557 = scmp.ne.s32.totalorder %s542, %s556
      %p558 = scmp.eq.s32.totalorder %s44, 0
      %p559 = por %p557, %p558
      %s561 = sadd.s32 %s560, 1
      %p564 = scmp.eq.s32.totalorder %s38, 1
      %p565 = scmp.ne.s32.totalorder %s560, %s562
      %p566 = scmp.eq.s32.totalorder %s38, 0
      %p567 = por %p565, %p566
      %p568 = scmp.ne.s32.totalorder %s560, %s562
      %p569 = scmp.eq.s32.totalorder %s43, 1
      %p570 = por %p568, %p569
      %p571 = scmp.ne.s32.totalorder %s562, %s563
      %p572 = scmp.eq.s32.totalorder %s43, 0
      %p573 = por %p571, %p572
      %p574 = scmp.ne.s32.totalorder %s562, %s563
      %p575 = scmp.eq.s32.totalorder %s44, 1
      %p576 = por %p574, %p575
      %p578 = scmp.ne.s32.totalorder %s563, %s577
      %p579 = scmp.eq.s32.totalorder %s44, 0
      %p580 = por %p578, %p579
      %s582 = sadd.s32 %s581, 1
      %p585 = scmp.eq.s32.totalorder %s38, 1
      %p586 = scmp.ne.s32.totalorder %s581, %s583
      %p587 = scmp.eq.s32.totalorder %s38, 0
      %p588 = por %p586, %p587
      %p589 = scmp.ne.s32.totalorder %s581, %s583
      %p590 = scmp.eq.s32.totalorder %s43, 1
      %p591 = por %p589, %p590
      %p592 = scmp.ne.s32.totalorder %s583, %s584
      %p593 = scmp.eq.s32.totalorder %s43, 0
      %p594 = por %p592, %p593
      %p595 = scmp.ne.s32.totalorder %s583, %s584
      %p596 = scmp.eq.s32.totalorder %s44, 1
      %p597 = por %p595, %p596
      %p599 = scmp.ne.s32.totalorder %s584, %s598
      %p600 = scmp.eq.s32.totalorder %s44, 0
      %p601 = por %p599, %p600
      %s603 = sadd.s32 %s602, 1
      %p606 = scmp.eq.s32.totalorder %s38, 1
      %p607 = scmp.ne.s32.totalorder %s602, %s604
      %p608 = scmp.eq.s32.totalorder %s38, 0
      %p609 = por %p607, %p608
      %p610 = scmp.ne.s32.totalorder %s602, %s604
      %p611 = scmp.eq.s32.totalorder %s43, 1
      %p612 = por %p610, %p611
      %p613 = scmp.ne.s32.totalorder %s604, %s605
      %p614 = scmp.eq.s32.totalorder %s43, 0
      %p615 = por %p613, %p614
      %p616 = scmp.ne.s32.totalorder %s604, %s605
      %p617 = scmp.eq.s32.totalorder %s44, 1
      %p618 = por %p616, %p617
      %p620 = scmp.ne.s32.totalorder %s605, %s619
      %p621 = scmp.eq.s32.totalorder %s44, 0
      %p622 = por %p620, %p621
      %s623 = ssub.s32 %s38, %s45
      %p624 = scmp.eq.s32.totalorder %s623, 0
      %s626 = sadd.s32 %s625, 1
      %s627 = scalar_select %p624, %s625, %s626
      %p630 = pneg %p624
      %p631 = scmp.eq.s32.totalorder %s38, 1
      %p632 = por %p630, %p631
      %p633 = scmp.ne.s32.totalorder %s625, %s628
      %p634 = scmp.eq.s32.totalorder %s38, 0
      %p635 = por %p633, %p634
      %p636 = scmp.ne.s32.totalorder %s625, %s628
      %p637 = scmp.eq.s32.totalorder %s43, 1
      %p638 = por %p636, %p637
      %p639 = scmp.ne.s32.totalorder %s628, %s629
      %p640 = scmp.eq.s32.totalorder %s43, 0
      %p641 = por %p639, %p640
      %p642 = scmp.ne.s32.totalorder %s628, %s629
      %p643 = scmp.eq.s32.totalorder %s44, 1
      %p644 = por %p642, %p643
      %p646 = scmp.ne.s32.totalorder %s629, %s645
      %p647 = scmp.eq.s32.totalorder %s44, 0
      %p648 = por %p646, %p647
      %s649 = ssub.s32 %s38, %s45
      %p650 = scmp.eq.s32.totalorder %s649, 0
      %s652 = sadd.s32 %s651, 1
      %s653 = scalar_select %p650, %s651, %s652
      %p656 = pneg %p650
      %p657 = scmp.eq.s32.totalorder %s38, 1
      %p658 = por %p656, %p657
      %p659 = scmp.ne.s32.totalorder %s651, %s654
      %p660 = scmp.eq.s32.totalorder %s38, 0
      %p661 = por %p659, %p660
      %p662 = scmp.ne.s32.totalorder %s651, %s654
      %p663 = scmp.eq.s32.totalorder %s43, 1
      %p664 = por %p662, %p663
      %p665 = scmp.ne.s32.totalorder %s654, %s655
      %p666 = scmp.eq.s32.totalorder %s43, 0
      %p667 = por %p665, %p666
      %p668 = scmp.ne.s32.totalorder %s654, %s655
      %p669 = scmp.eq.s32.totalorder %s44, 1
      %p670 = por %p668, %p669
      %p672 = scmp.ne.s32.totalorder %s655, %s671
      %p673 = scmp.eq.s32.totalorder %s44, 0
      %p674 = por %p672, %p673
      %p675 = scmp.le.s32.totalorder 1, %s38
      %p676 = scmp.lt.s32.totalorder %s38, 3
      %p677 = pnand %p675, %p676
      %p678 = pneg %p677
      // Predicated region
      $region9: #{_lambda_.1} parent=5 // pred_check
        _
      $region10: #{_lambda_.1} parent=5 // pred_check_branch
        %680 = sbr.rel (%p677) target = $region12
      $region11: #{_lambda_.1} parent=5 // pred_region
        %s681 = ssub.s32 %s38, 1
        // Predicated region
        $region13: #{_lambda_.1} parent=11 // pred_check
          %p682 = pneg %p111
        $region14: #{_lambda_.1} parent=11 // pred_check_branch
          %684 = sbr.rel (%p682) target = $region16
        $region15: #{_lambda_.1} parent=11 // pred_region
          _
        $region16: #{_lambda_.1} parent=11 // pred_fallthru
          _
        // Predicated region
        $region17: #{_lambda_.1} parent=11 // pred_check
          %p685 = pneg %p132
        $region18: #{_lambda_.1} parent=11 // pred_check_branch
          %687 = sbr.rel (%p685) target = $region20
        $region19: #{_lambda_.1} parent=11 // pred_region
          _
        $region20: #{_lambda_.1} parent=11 // pred_fallthru
          _
        // Predicated region
        $region21: #{_lambda_.1} parent=11 // pred_check
          %p688 = pneg %p153
        $region22: #{_lambda_.1} parent=11 // pred_check_branch
          %690 = sbr.rel (%p688) target = $region24
        $region23: #{_lambda_.1} parent=11 // pred_region
          _
        $region24: #{_lambda_.1} parent=11 // pred_fallthru
          _
        // Predicated region
        $region25: #{_lambda_.1} parent=11 // pred_check
          %p691 = pneg %p174
        $region26: #{_lambda_.1} parent=11 // pred_check_branch
          %693 = sbr.rel (%p691) target = $region28
        $region27: #{_lambda_.1} parent=11 // pred_region
          _
        $region28: #{_lambda_.1} parent=11 // pred_fallthru
          _
        // Predicated region
        $region29: #{_lambda_.1} parent=11 // pred_check
          %p694 = pneg %p195
        $region30: #{_lambda_.1} parent=11 // pred_check_branch
          %696 = sbr.rel (%p694) target = $region32
        $region31: #{_lambda_.1} parent=11 // pred_region
          _
        $region32: #{_lambda_.1} parent=11 // pred_fallthru
          _
        // Predicated region
        $region33: #{_lambda_.1} parent=11 // pred_check
          %p697 = pneg %p216
        $region34: #{_lambda_.1} parent=11 // pred_check_branch
          %699 = sbr.rel (%p697) target = $region36
        $region35: #{_lambda_.1} parent=11 // pred_region
          _
        $region36: #{_lambda_.1} parent=11 // pred_fallthru
          _
        // Predicated region
        $region37: #{_lambda_.1} parent=11 // pred_check
          %p700 = pneg %p237
        $region38: #{_lambda_.1} parent=11 // pred_check_branch
          %702 = sbr.rel (%p700) target = $region40
        $region39: #{_lambda_.1} parent=11 // pred_region
          _
        $region40: #{_lambda_.1} parent=11 // pred_fallthru
          _
        // Predicated region
        $region41: #{_lambda_.1} parent=11 // pred_check
          %p703 = pneg %p258
        $region42: #{_lambda_.1} parent=11 // pred_check_branch
          %705 = sbr.rel (%p703) target = $region44
        $region43: #{_lambda_.1} parent=11 // pred_region
          _
        $region44: #{_lambda_.1} parent=11 // pred_fallthru
          _
        // Predicated region
        $region45: #{_lambda_.1} parent=11 // pred_check
          %p706 = pneg %p279
        $region46: #{_lambda_.1} parent=11 // pred_check_branch
          %708 = sbr.rel (%p706) target = $region48
        $region47: #{_lambda_.1} parent=11 // pred_region
          _
        $region48: #{_lambda_.1} parent=11 // pred_fallthru
          _
        // Predicated region
        $region49: #{_lambda_.1} parent=11 // pred_check
          %p709 = pneg %p300
        $region50: #{_lambda_.1} parent=11 // pred_check_branch
          %711 = sbr.rel (%p709) target = $region52
        $region51: #{_lambda_.1} parent=11 // pred_region
          _
        $region52: #{_lambda_.1} parent=11 // pred_fallthru
          _
        // Predicated region
        $region53: #{_lambda_.1} parent=11 // pred_check
          %p712 = pneg %p321
        $region54: #{_lambda_.1} parent=11 // pred_check_branch
          %714 = sbr.rel (%p712) target = $region56
        $region55: #{_lambda_.1} parent=11 // pred_region
          _
        $region56: #{_lambda_.1} parent=11 // pred_fallthru
          _
        // Predicated region
        $region57: #{_lambda_.1} parent=11 // pred_check
          %p715 = pneg %p342
        $region58: #{_lambda_.1} parent=11 // pred_check_branch
          %717 = sbr.rel (%p715) target = $region60
        $region59: #{_lambda_.1} parent=11 // pred_region
          _
        $region60: #{_lambda_.1} parent=11 // pred_fallthru
          _
        // Predicated region
        $region61: #{_lambda_.1} parent=11 // pred_check
          %p718 = pneg %p363
        $region62: #{_lambda_.1} parent=11 // pred_check_branch
          %720 = sbr.rel (%p718) target = $region64
        $region63: #{_lambda_.1} parent=11 // pred_region
          _
        $region64: #{_lambda_.1} parent=11 // pred_fallthru
          _
        // Predicated region
        $region65: #{_lambda_.1} parent=11 // pred_check
          %p721 = pneg %p384
        $region66: #{_lambda_.1} parent=11 // pred_check_branch
          %723 = sbr.rel (%p721) target = $region68
        $region67: #{_lambda_.1} parent=11 // pred_region
          _
        $region68: #{_lambda_.1} parent=11 // pred_fallthru
          _
        // Predicated region
        $region69: #{_lambda_.1} parent=11 // pred_check
          %p724 = pneg %p405
        $region70: #{_lambda_.1} parent=11 // pred_check_branch
          %726 = sbr.rel (%p724) target = $region72
        $region71: #{_lambda_.1} parent=11 // pred_region
          _
        $region72: #{_lambda_.1} parent=11 // pred_fallthru
          _
        // Predicated region
        $region73: #{_lambda_.1} parent=11 // pred_check
          %p727 = pneg %p426
        $region74: #{_lambda_.1} parent=11 // pred_check_branch
          %729 = sbr.rel (%p727) target = $region76
        $region75: #{_lambda_.1} parent=11 // pred_region
          _
        $region76: #{_lambda_.1} parent=11 // pred_fallthru
          _
        // Predicated region
        $region77: #{_lambda_.1} parent=11 // pred_check
          %p730 = pneg %p447
        $region78: #{_lambda_.1} parent=11 // pred_check_branch
          %732 = sbr.rel (%p730) target = $region80
        $region79: #{_lambda_.1} parent=11 // pred_region
          _
        $region80: #{_lambda_.1} parent=11 // pred_fallthru
          _
        // Predicated region
        $region81: #{_lambda_.1} parent=11 // pred_check
          %p733 = pneg %p468
        $region82: #{_lambda_.1} parent=11 // pred_check_branch
          %735 = sbr.rel (%p733) target = $region84
        $region83: #{_lambda_.1} parent=11 // pred_region
          _
        $region84: #{_lambda_.1} parent=11 // pred_fallthru
          _
        // Predicated region
        $region85: #{_lambda_.1} parent=11 // pred_check
          %p736 = pneg %p489
        $region86: #{_lambda_.1} parent=11 // pred_check_branch
          %738 = sbr.rel (%p736) target = $region88
        $region87: #{_lambda_.1} parent=11 // pred_region
          _
        $region88: #{_lambda_.1} parent=11 // pred_fallthru
          _
        // Predicated region
        $region89: #{_lambda_.1} parent=11 // pred_check
          %p739 = pneg %p510
        $region90: #{_lambda_.1} parent=11 // pred_check_branch
          %741 = sbr.rel (%p739) target = $region92
        $region91: #{_lambda_.1} parent=11 // pred_region
          _
        $region92: #{_lambda_.1} parent=11 // pred_fallthru
          _
        // Predicated region
        $region93: #{_lambda_.1} parent=11 // pred_check
          %p742 = pneg %p531
        $region94: #{_lambda_.1} parent=11 // pred_check_branch
          %744 = sbr.rel (%p742) target = $region96
        $region95: #{_lambda_.1} parent=11 // pred_region
          _
        $region96: #{_lambda_.1} parent=11 // pred_fallthru
          _
        // Predicated region
        $region97: #{_lambda_.1} parent=11 // pred_check
          %p745 = pneg %p552
        $region98: #{_lambda_.1} parent=11 // pred_check_branch
          %747 = sbr.rel (%p745) target = $region100
        $region99: #{_lambda_.1} parent=11 // pred_region
          _
        $region100: #{_lambda_.1} parent=11 // pred_fallthru
          _
        // Predicated region
        $region101: #{_lambda_.1} parent=11 // pred_check
          %p748 = pneg %p573
        $region102: #{_lambda_.1} parent=11 // pred_check_branch
          %750 = sbr.rel (%p748) target = $region104
        $region103: #{_lambda_.1} parent=11 // pred_region
          _
        $region104: #{_lambda_.1} parent=11 // pred_fallthru
          _
        // Predicated region
        $region105: #{_lambda_.1} parent=11 // pred_check
          %p751 = pneg %p594
        $region106: #{_lambda_.1} parent=11 // pred_check_branch
          %753 = sbr.rel (%p751) target = $region108
        $region107: #{_lambda_.1} parent=11 // pred_region
          _
        $region108: #{_lambda_.1} parent=11 // pred_fallthru
          _
        // Predicated region
        $region109: #{_lambda_.1} parent=11 // pred_check
          %p754 = pneg %p615
        $region110: #{_lambda_.1} parent=11 // pred_check_branch
          %756 = sbr.rel (%p754) target = $region112
        $region111: #{_lambda_.1} parent=11 // pred_region
          _
        $region112: #{_lambda_.1} parent=11 // pred_fallthru
          _
      $region12: #{_lambda_.1} parent=5 // pred_fallthru
        _
      %p757 = scmp.lt.s32.totalorder %s38, 2
      // Predicated region
      $region113: #{_lambda_.1} parent=5 // pred_check
        %p758 = pneg %p757
      $region114: #{_lambda_.1} parent=5 // pred_check_branch
        %760 = sbr.rel (%p758) target = $region116
      $region115: #{_lambda_.1} parent=5 // pred_region
        // Predicated region
        $region117: #{_lambda_.1} parent=115 // pred_check
          %p761 = pneg %p58
        $region118: #{_lambda_.1} parent=115 // pred_check_branch
          %763 = sbr.rel (%p761) target = $region120
        $region119: #{_lambda_.1} parent=115 // pred_region
          %p764 = scmp.lt.s32.totalorder %s38, 1
          %s765 = scalar_select %p764, %s38, 1
          %s766 = smul.addr %s765, 4
          %s767 = scalar_lea.vmem %s0, %s766
        $region120: #{_lambda_.1} parent=115 // pred_fallthru
          _
        // Predicated region
        $region121: #{_lambda_.1} parent=115 // pred_check
          %p768 = pneg %p84
        $region122: #{_lambda_.1} parent=115 // pred_check_branch
          %770 = sbr.rel (%p768) target = $region124
        $region123: #{_lambda_.1} parent=115 // pred_region
          %p771 = scmp.lt.s32.totalorder %s38, 1
          %s772 = scalar_select %p771, %s38, 1
          %s773 = smul.addr %s772, 8
          %s774 = scalar_lea.vmem %s1, %s773
        $region124: #{_lambda_.1} parent=115 // pred_fallthru
          _
      $region116: #{_lambda_.1} parent=5 // pred_fallthru
        _
      %p775 = scmp.le.s32.totalorder 1, %s38
      %p776 = scmp.lt.s32.totalorder %s38, 3
      %p777 = pnand %p775, %p776
      %p778 = pneg %p777
      // Predicated region
      $region125: #{_lambda_.1} parent=5 // pred_check
        _
      $region126: #{_lambda_.1} parent=5 // pred_check_branch
        %780 = sbr.rel (%p777) target = $region128
      $region127: #{_lambda_.1} parent=5 // pred_region
        %s781 = ssub.s32 %s38, 1
        %p782 = scmp.lt.s32.totalorder %s43, 1
        %s783 = scalar_select %p782, %s43, 1
        %s784 = smul.addr %s783, 4
        %s785 = scalar_lea.vmem %s0, %s784
        %p786 = pneg %p64
        %p787 = pneg %p61
        %p788 = scmp.lt.s32.totalorder %s43, 1
        %s789 = scalar_select %p788, %s43, 1
        %s790 = smul.addr %s789, 8
        %s791 = scalar_lea.vmem %s1, %s790
        %p792 = pneg %p90
        %p793 = pneg %p87
        %p794 = pneg %p111
        %p795 = pneg %p108
        %p796 = pneg %p132
        %p797 = pneg %p129
        %p798 = pneg %p153
        %p799 = pneg %p150
        %p800 = pneg %p174
        %p801 = pneg %p171
        %p802 = pneg %p195
        %p803 = pneg %p192
        %p804 = pneg %p216
        %p805 = pneg %p213
        %p806 = pneg %p237
        %p807 = pneg %p234
        %p808 = pneg %p258
        %p809 = pneg %p255
        %p810 = pneg %p279
        %p811 = pneg %p276
        %p812 = pneg %p300
        %p813 = pneg %p297
        %p814 = pneg %p321
        %p815 = pneg %p318
        %p816 = pneg %p342
        %p817 = pneg %p339
        %p818 = pneg %p363
        %p819 = pneg %p360
        %p820 = pneg %p384
        %p821 = pneg %p381
        %p822 = pneg %p405
        %p823 = pneg %p402
        %p824 = pneg %p426
        %p825 = pneg %p423
        %p826 = pneg %p447
        %p827 = pneg %p444
        %p828 = pneg %p468
        %p829 = pneg %p465
        %p830 = pneg %p489
        %p831 = pneg %p486
        %p832 = pneg %p510
        %p833 = pneg %p507
        %p834 = pneg %p531
        %p835 = pneg %p528
        %p836 = pneg %p552
        %p837 = pneg %p549
        %p838 = pneg %p573
        %p839 = pneg %p570
        %p840 = pneg %p594
        %p841 = pneg %p591
        %p842 = pneg %p615
        %p843 = pneg %p612
        %p844 = pneg %p641
        %p845 = pneg %p638
        %s846 = sand.u32 %s628, 1
        %s847 = scalar_lea.sflag [#allocation3], %s846
        %s848 = sand.u32 %s628, 1
        %s849 = scalar_lea.vmem [#allocation2], %s848
        %p850 = pneg %p667
        %p851 = pneg %p664
        %p852 = scmp.lt.s32.totalorder %s43, 1
        %s853 = scalar_select %p852, %s43, 1
        %s854 = smul.addr %s853, 8
        %s855 = smul.addr %s854, 8
        %s856 = scalar_lea.vmem %s28, %s855
        %p857 = scmp.lt.s32.totalorder %s43, 1
        %s858 = scalar_select %p857, %s43, 1
        %s859 = smul.addr %s858, 4
        %s860 = scalar_lea.vmem %s0, %s859
        %p861 = scmp.lt.s32.totalorder %s43, 1
        %s862 = scalar_select %p861, %s43, 1
        %s863 = smul.addr %s862, 8
        %s864 = scalar_lea.vmem %s1, %s863
        %p865 = scmp.lt.s32.totalorder %s43, 1
        %s866 = scalar_select %p865, %s43, 1
        %s867 = smul.addr %s866, 8
        %s868 = smul.addr %s867, 8
        %s869 = scalar_lea.vmem %s28, %s868
        %v870 = vld [vmem:[%s860] sm:$0x7]
        %v871 = vld [vmem:[%s2] sm:$0xff]
        %v872 = vld [vmem:[%s3] sm:$0xff]
        %874 = vset.pattern.permute.xlu0 0
        %875 = vperm.xlu0 %874, %v872
        %v876 = vpop.permute.xlu0 %875
        %vm878 = vcmask 23552
        %v880 = vsel %vm878, %v871, 0
        %vm882 = vcmask 1042432
        %v884 = vsel %vm882, %v870, 0
        %886 = vmatpush.msra.mxu0 0.0
        %887 = vmatpush.msra.mxu0 0.0
        %888 = vmatpush.msra.mxu0 0.0
        %889 = vmatpush.msra.mxu0 0.0
        %890 = vmatpush.msra.mxu0 0.0
        %891 = vmatpush.msra.mxu0 0.0
        %892 = vmatpush.msra.mxu0 0.0
        %893 = vmatpush.msra.mxu0 0.0
        %894 = vmatpush.msra.mxu0 0.0
        %895 = vmatpush.msra.mxu0 0.0
        %896 = vmatpush.msra.mxu0 0.0
        %897 = vmatpush.msra.mxu0 0.0
        %898 = vmatpush.msra.mxu0 0.0
        %899 = vmatpush.msra.mxu0 0.0
        %900 = vmatpush.msra.mxu0 0.0
        %901 = vmatpush.msra.mxu0 %v884
        %902 = vmatmul.f32.gmra.mxu0 %v880
        %v903 = vpop.f32.mrf.mxu0
        %v904 = vadd.f32 %v876, %v903
        %905 = vdwg.mxu0
        %v906 = vmax.f32 %v904, 0.0
        %v907 = vld [vmem:[%s4] sm:$0xff]
        %v908 = vld [vmem:[%s4 + $0x8] sm:$0xff]
        %v909 = vld [vmem:[%s4 + $0x10] sm:$0xff]
        %v910 = vld [vmem:[%s4 + $0x18] sm:$0xff]
        %v911 = vld [vmem:[%s5] sm:$0xff]
        %v912 = vld [vmem:[%s5 + $0x8] sm:$0xff]
        %v913 = vld [vmem:[%s5 + $0x10] sm:$0xff]
        %v914 = vld [vmem:[%s5 + $0x18] sm:$0xff]
        %916 = vset.pattern.permute.xlu0 0
        %917 = vperm.xlu0 %916, %v911
        %v918 = vpop.permute.xlu0 %917
        %921 = vset.pattern.permute.xlu0 0
        %922 = vperm.xlu0 %921, %v912
        %v923 = vpop.permute.xlu0 %922
        %926 = vset.pattern.permute.xlu0 0
        %927 = vperm.xlu0 %926, %v913
        %v928 = vpop.permute.xlu0 %927
        %931 = vset.pattern.permute.xlu0 0
        %932 = vperm.xlu0 %931, %v914
        %v933 = vpop.permute.xlu0 %932
        %vm935 = vcmask 64512
        %v937 = vsel %vm935, %v907, 0
        %v940 = vsel %vm935, %v908, 0
        %v943 = vsel %vm935, %v909, 0
        %v946 = vsel %vm935, %v910, 0
        %948 = vmatpush.msra.mxu0 0.0
        %949 = vmatpush.msra.mxu0 0.0
        %950 = vmatpush.msra.mxu0 0.0
        %951 = vmatpush.msra.mxu0 0.0
        %952 = vmatpush.msra.mxu0 0.0
        %953 = vmatpush.msra.mxu0 0.0
        %954 = vmatpush.msra.mxu0 0.0
        %955 = vmatpush.msra.mxu0 0.0
        %956 = vmatpush.msra.mxu0 0.0
        %957 = vmatpush.msra.mxu0 0.0
        %958 = vmatpush.msra.mxu0 0.0
        %959 = vmatpush.msra.mxu0 0.0
        %960 = vmatpush.msra.mxu0 0.0
        %961 = vmatpush.msra.mxu0 0.0
        %962 = vmatpush.msra.mxu0 0.0
        %963 = vmatpush.msra.mxu0 %v906
        %964 = vmatmul.f32.gmra.mxu0 %v937
        %v965 = vpop.f32.mrf.mxu0
        %v966 = vadd.f32 %v918, %v965
        %967 = vmatmul.f32.gmra.mxu0 %v940
        %v968 = vpop.f32.mrf.mxu0
        %v969 = vadd.f32 %v923, %v968
        %970 = vmatmul.f32.gmra.mxu0 %v943
        %v971 = vpop.f32.mrf.mxu0
        %v972 = vadd.f32 %v928, %v971
        %973 = vmatmul.f32.gmra.mxu0 %v946
        %v974 = vpop.f32.mrf.mxu0
        %v975 = vadd.f32 %v933, %v974
        %976 = vdwg.mxu0
        %vm977 = vcmask 130048
        %v978 = vsel %vm977, %v966, -inf
        %v979 = vsel %vm977, %v969, -inf
        %v980 = vsel %vm977, %v972, -inf
        %v981 = vsel %vm977, %v975, -inf
        %v982 = vmax.f32 %v978, %v979
        %v983 = vmax.f32 %v980, %v981
        %v984 = vmax.f32 %v982, %v983
        %v985 = vrot.slane %v984, 4
        %v986 = vmax.f32 %v984, %v985
        %v987 = vrot.slane %v986, 2
        %v988 = vmax.f32 %v986, %v987
        %v989 = vrot.slane %v988, 1
        %v990 = vmax.f32 %v988, %v989
        %v991 = vlaneseq
        %v992 = vshrl.u32 %v991, 7
        %v993 = vadd.s32 %v992, 8
        %v994 = vadd.s32 %v992, 16
        %v995 = vadd.s32 %v992, 24
        %vm996 = vcmp.eq.f32.partialorder %v966, %v990
        %vm997 = vcmp.eq.f32.partialorder %v969, %v990
        %vm998 = vcmp.eq.f32.partialorder %v972, %v990
        %vm999 = vcmp.eq.f32.partialorder %v975, %v990
        %v1000 = vsel %vm996, %v992, 32
        %v1001 = vsel %vm997, %v993, 32
        %v1002 = vsel %vm998, %v994, 32
        %v1003 = vsel %vm999, %v995, 32
        %v1004 = vsel %vm977, %v1000, 2147483647
        %v1005 = vsel %vm977, %v1001, 2147483647
        %v1006 = vsel %vm977, %v1002, 2147483647
        %v1007 = vsel %vm977, %v1003, 2147483647
        %vm1008 = vcmp.lt.s32.totalorder %v1004, %v1005
        %v1009 = vsel %vm1008, %v1004, %v1005
        %vm1010 = vcmp.lt.s32.totalorder %v1006, %v1007
        %v1011 = vsel %vm1010, %v1006, %v1007
        %vm1012 = vcmp.lt.s32.totalorder %v1009, %v1011
        %v1013 = vsel %vm1012, %v1009, %v1011
        %v1014 = vrot.slane %v1013, 4
        %vm1015 = vcmp.lt.s32.totalorder %v1013, %v1014
        %v1016 = vsel %vm1015, %v1013, %v1014
        %v1017 = vrot.slane %v1016, 2
        %vm1018 = vcmp.lt.s32.totalorder %v1016, %v1017
        %v1019 = vsel %vm1018, %v1016, %v1017
        %v1020 = vrot.slane %v1019, 1
        %vm1021 = vcmp.lt.s32.totalorder %v1019, %v1020
        %v1022 = vsel %vm1021, %v1019, %v1020
        %vm1023 = vcmask 122880
        %1024 = vst.msk [vmem:[%s849] sm:$0x1] %vm1023, %v1022
        %v1025 = vld [vmem:[%s864] sm:$0xff]
        %v1026 = vld [vmem:[%s6] sm:$0xff]
        %v1027 = vadd.f32 %v1025, %v1026
        %v1028 = vld [vmem:[%s6 + $0x8] sm:$0xff]
        %v1029 = vld [vmem:[%s6 + $0x10] sm:$0xff]
        %v1030 = vld [vmem:[%s6 + $0x18] sm:$0xff]
        %v1031 = vld [vmem:[%s6 + $0x20] sm:$0xff]
        %v1032 = vadd.f32 %v966, %v1028
        %v1033 = vadd.f32 %v969, %v1029
        %v1034 = vadd.f32 %v972, %v1030
        %v1035 = vadd.f32 %v975, %v1031
        %v1036 = vld [vmem:[%s7] sm:$0x1]
        %v1037 = vld [vmem:[%s8] sm:$0x1]
        %v1038 = vsel %vm977, %v1027, 0.0
        %1039 = vadd.xlane.f32.xlu0 %v1038
        %v1040 = vpop.xlane.xlu0 %1039
        %v1041 = vsel %vm977, %v1032, 0.0
        %1042 = vadd.xlane.f32.xlu0 %v1041
        %v1043 = vpop.xlane.xlu0 %1042
        %v1044 = vsel %vm977, %v1033, 0.0
        %1045 = vadd.xlane.f32.xlu0 %v1044
        %v1046 = vpop.xlane.xlu0 %1045
        %v1047 = vsel %vm977, %v1034, 0.0
        %1048 = vadd.xlane.f32.xlu0 %v1047
        %v1049 = vpop.xlane.xlu0 %1048
        %v1050 = vsel %vm977, %v1035, 0.0
        %1051 = vadd.xlane.f32.xlu0 %v1050
        %v1052 = vpop.xlane.xlu0 %1051
        %v1053 = vrcp.pop 16.0
        %v1054 = vmul.f32 16.0, %v1053
        %v1055 = vsub.f32 1.0, %v1054
        %v1056 = vmul.f32 %v1053, %v1055
        %v1057 = vadd.f32 %v1053, %v1056
        %vm1058 = vweird.f32 %v1053
        %v1059 = vsel %vm1058, %v1053, %v1057
        %v1060 = vmul.f32 %v1040, %v1059
        %v1061 = vmul.f32 %v1043, %v1059
        %v1062 = vmul.f32 %v1046, %v1059
        %v1063 = vmul.f32 %v1049, %v1059
        %v1064 = vmul.f32 %v1052, %v1059
        %v1065 = vsub.f32 %v1027, %v1060
        %v1066 = vsub.f32 %v1032, %v1061
        %v1067 = vsub.f32 %v1033, %v1062
        %v1068 = vsub.f32 %v1034, %v1063
        %v1069 = vsub.f32 %v1035, %v1064
        %v1070 = vmul.f32 %v1065, %v1065
        %v1071 = vmul.f32 %v1066, %v1066
        %v1072 = vmul.f32 %v1067, %v1067
        %v1073 = vmul.f32 %v1068, %v1068
        %v1074 = vmul.f32 %v1069, %v1069
        %v1075 = vsel %vm977, %v1070, 0.0
        %1076 = vadd.xlane.f32.xlu0 %v1075
        %v1077 = vpop.xlane.xlu0 %1076
        %v1078 = vsel %vm977, %v1071, 0.0
        %1079 = vadd.xlane.f32.xlu0 %v1078
        %v1080 = vpop.xlane.xlu0 %1079
        %v1081 = vsel %vm977, %v1072, 0.0
        %1082 = vadd.xlane.f32.xlu0 %v1081
        %v1083 = vpop.xlane.xlu0 %1082
        %v1084 = vsel %vm977, %v1073, 0.0
        %1085 = vadd.xlane.f32.xlu0 %v1084
        %v1086 = vpop.xlane.xlu0 %1085
        %v1087 = vsel %vm977, %v1074, 0.0
        %1088 = vadd.xlane.f32.xlu0 %v1087
        %v1089 = vpop.xlane.xlu0 %1088
        %v1090 = vmul.f32 %v1077, %v1059
        %v1091 = vmul.f32 %v1080, %v1059
        %v1092 = vmul.f32 %v1083, %v1059
        %v1093 = vmul.f32 %v1086, %v1059
        %v1094 = vmul.f32 %v1089, %v1059
        %v1095 = vadd.f32 %v1090, 1e-05
        %v1096 = vadd.f32 %v1091, 1e-05
        %v1097 = vadd.f32 %v1092, 1e-05
        %v1098 = vadd.f32 %v1093, 1e-05
        %v1099 = vadd.f32 %v1094, 1e-05
        %v1100 = vrsqrt.pop %v1095
        %v1101 = vmul.f32 %v1100, %v1095
        %v1102 = vmul.f32 %v1101, %v1100
        %v1103 = vmul.f32 0.5, %v1102
        %v1104 = vsub.f32 1.5, %v1103
        %v1105 = vmul.f32 %v1100, %v1104
        %vm1106 = vweird.f32 %v1095
        %vm1107 = vweird.f32 %v1100
        %vm1108 = vmor %vm1106, %vm1107
        %v1109 = vsel %vm1108, %v1100, %v1105
        %v1110 = vrsqrt.pop %v1096
        %v1111 = vmul.f32 %v1110, %v1096
        %v1112 = vmul.f32 %v1111, %v1110
        %v1113 = vmul.f32 0.5, %v1112
        %v1114 = vsub.f32 1.5, %v1113
        %v1115 = vmul.f32 %v1110, %v1114
        %vm1116 = vweird.f32 %v1096
        %vm1117 = vweird.f32 %v1110
        %vm1118 = vmor %vm1116, %vm1117
        %v1119 = vsel %vm1118, %v1110, %v1115
        %v1120 = vrsqrt.pop %v1097
        %v1121 = vmul.f32 %v1120, %v1097
        %v1122 = vmul.f32 %v1121, %v1120
        %v1123 = vmul.f32 0.5, %v1122
        %v1124 = vsub.f32 1.5, %v1123
        %v1125 = vmul.f32 %v1120, %v1124
        %vm1126 = vweird.f32 %v1097
        %vm1127 = vweird.f32 %v1120
        %vm1128 = vmor %vm1126, %vm1127
        %v1129 = vsel %vm1128, %v1120, %v1125
        %v1130 = vrsqrt.pop %v1098
        %v1131 = vmul.f32 %v1130, %v1098
        %v1132 = vmul.f32 %v1131, %v1130
        %v1133 = vmul.f32 0.5, %v1132
        %v1134 = vsub.f32 1.5, %v1133
        %v1135 = vmul.f32 %v1130, %v1134
        %vm1136 = vweird.f32 %v1098
        %vm1137 = vweird.f32 %v1130
        %vm1138 = vmor %vm1136, %vm1137
        %v1139 = vsel %vm1138, %v1130, %v1135
        %v1140 = vrsqrt.pop %v1099
        %v1141 = vmul.f32 %v1140, %v1099
        %v1142 = vmul.f32 %v1141, %v1140
        %v1143 = vmul.f32 0.5, %v1142
        %v1144 = vsub.f32 1.5, %v1143
        %v1145 = vmul.f32 %v1140, %v1144
        %vm1146 = vweird.f32 %v1099
        %vm1147 = vweird.f32 %v1140
        %vm1148 = vmor %vm1146, %vm1147
        %v1149 = vsel %vm1148, %v1140, %v1145
        %v1150 = vmul.f32 %v1065, %v1109
        %v1151 = vmul.f32 %v1066, %v1119
        %v1152 = vmul.f32 %v1067, %v1129
        %v1153 = vmul.f32 %v1068, %v1139
        %v1154 = vmul.f32 %v1069, %v1149
        %v1156 = vperm.slane %v1036, 0
        %v1158 = vmul.f32 %v1150, %v1156
        %v1159 = vmul.f32 %v1151, %v1156
        %v1160 = vmul.f32 %v1152, %v1156
        %v1161 = vmul.f32 %v1153, %v1156
        %v1162 = vmul.f32 %v1154, %v1156
        %v1164 = vperm.slane %v1037, 0
        %v1166 = vadd.f32 %v1158, %v1164
        %v1167 = vadd.f32 %v1159, %v1164
        %v1168 = vadd.f32 %v1160, %v1164
        %v1169 = vadd.f32 %v1161, %v1164
        %v1170 = vadd.f32 %v1162, %v1164
        %v1171 = vld [vmem:[%s9] sm:$0xff]
        %v1172 = vld [vmem:[%s9 + $0x8] sm:$0xff]
        %v1173 = vld [vmem:[%s10] sm:$0x1]
        %v1175 = vperm.slane %v1173, 0
        %v1178 = vsel %vm977, %v1166, 0
        %v1181 = vsel %vm977, %v1167, 0
        %v1184 = vsel %vm977, %v1168, 0
        %v1187 = vsel %vm977, %v1169, 0
        %v1190 = vsel %vm977, %v1170, 0
        %1192 = vmatpush.msra.mxu0 0.0
        %1193 = vmatpush.msra.mxu0 0.0
        %1194 = vmatpush.msra.mxu0 0.0
        %1195 = vmatpush.msra.mxu0 0.0
        %1196 = vmatpush.msra.mxu0 0.0
        %1197 = vmatpush.msra.mxu0 0.0
        %1198 = vmatpush.msra.mxu0 0.0
        %1199 = vmatpush.msra.mxu0 0.0
        %1200 = vmatpush.msra.mxu0 0.0
        %1201 = vmatpush.msra.mxu0 0.0
        %1202 = vmatpush.msra.mxu0 0.0
        %1203 = vmatpush.msra.mxu0 0.0
        %1204 = vmatpush.msra.mxu0 0.0
        %1205 = vmatpush.msra.mxu0 0.0
        %1206 = vmatpush.msra.mxu0 %v1172
        %1207 = vmatpush.msra.mxu0 %v1171
        %1208 = vmatmul.f32.gmra.mxu0 %v1178
        %v1209 = vpop.f32.mrf.mxu0
        %v1210 = vadd.f32 %v1175, %v1209
        %1211 = vmatmul.f32.gmra.mxu0 %v1181
        %v1212 = vpop.f32.mrf.mxu0
        %v1213 = vadd.f32 %v1175, %v1212
        %1214 = vmatmul.f32.gmra.mxu0 %v1184
        %v1215 = vpop.f32.mrf.mxu0
        %v1216 = vadd.f32 %v1175, %v1215
        %1217 = vmatmul.f32.gmra.mxu0 %v1187
        %v1218 = vpop.f32.mrf.mxu0
        %v1219 = vadd.f32 %v1175, %v1218
        %1220 = vmatmul.f32.gmra.mxu0 %v1190
        %v1221 = vpop.f32.mrf.mxu0
        %v1222 = vadd.f32 %v1175, %v1221
        %1223 = vdwg.mxu0
        %1229 = vrot.lane.b32.xlu0 %v1210, 120
        %v1230 = vpop.permute.xlu0 %1229
        %1231 = vrot.lane.b32.xlu0 %v1213, 120
        %v1232 = vpop.permute.xlu0 %1231
        %1233 = vrot.lane.b32.xlu0 %v1216, 120
        %v1234 = vpop.permute.xlu0 %1233
        %1235 = vrot.lane.b32.xlu0 %v1219, 120
        %v1236 = vpop.permute.xlu0 %1235
        %1237 = vrot.lane.b32.xlu0 %v1222, 120
        %v1238 = vpop.permute.xlu0 %1237
        %v1239 = vsel %vm935, %v1210, 0
        %v1241 = vsel %vm935, %v1213, 0
        %v1243 = vsel %vm935, %v1216, 0
        %v1245 = vsel %vm935, %v1219, 0
        %v1247 = vsel %vm935, %v1222, 0
        %v1249 = vsel %vm935, %v1230, 0
        %v1251 = vsel %vm935, %v1232, 0
        %v1253 = vsel %vm935, %v1234, 0
        %v1255 = vsel %vm935, %v1236, 0
        %v1257 = vsel %vm935, %v1238, 0
        %1259 = vmatpush.xpose.msra.mxu0 0.0
        %1260 = vmatpush.xpose.msra.mxu0 0.0
        %1261 = vmatpush.xpose.msra.mxu0 0.0
        %1262 = vmatpush.xpose.msra.mxu0 0.0
        %1263 = vmatpush.xpose.msra.mxu0 0.0
        %1264 = vmatpush.xpose.msra.mxu0 0.0
        %1265 = vmatpush.xpose.msra.mxu0 0.0
        %1266 = vmatpush.xpose.msra.mxu0 0.0
        %1267 = vmatpush.xpose.msra.mxu0 0.0
        %1268 = vmatpush.xpose.msra.mxu0 0.0
        %1269 = vmatpush.xpose.msra.mxu0 0.0
        %1270 = vmatpush.xpose.msra.mxu0 %v1257
        %1271 = vmatpush.xpose.msra.mxu0 %v1255
        %1272 = vmatpush.xpose.msra.mxu0 %v1253
        %1273 = vmatpush.xpose.msra.mxu0 %v1251
        %1274 = vmatpush.xpose.msra.mxu0 %v1249
        %1275 = vmatmul.f32.gmra.mxu0 %v1239
        %v1276 = vpop.f32.mrf.mxu0
        %v1277 = vadd.f32 0.0, %v1276
        %1278 = vmatmul.f32.gmra.mxu0 %v1241
        %v1279 = vpop.f32.mrf.mxu0
        %v1280 = vadd.f32 0.0, %v1279
        %1281 = vmatmul.f32.gmra.mxu0 %v1243
        %v1282 = vpop.f32.mrf.mxu0
        %v1283 = vadd.f32 0.0, %v1282
        %1284 = vmatmul.f32.gmra.mxu0 %v1245
        %v1285 = vpop.f32.mrf.mxu0
        %v1286 = vadd.f32 0.0, %v1285
        %1287 = vmatmul.f32.gmra.mxu0 %v1247
        %v1288 = vpop.f32.mrf.mxu0
        %v1289 = vadd.f32 0.0, %v1288
        %1290 = vdwg.mxu0
        %v1291 = vmul.f32 %v1277, 0.35355338
        %v1292 = vmul.f32 %v1280, 0.35355338
        %v1293 = vmul.f32 %v1283, 0.35355338
        %v1294 = vmul.f32 %v1286, 0.35355338
        %v1295 = vmul.f32 %v1289, 0.35355338
        %vm1296 = vcmask 326656
        %v1297 = vsel %vm1296, %v1291, -inf
        %1298 = vmax.xlane.f32.xlu0 %v1297
        %v1299 = vpop.xlane.xlu0 %1298
        %v1300 = vsel %vm1296, %v1292, -inf
        %1301 = vmax.xlane.f32.xlu0 %v1300
        %v1302 = vpop.xlane.xlu0 %1301
        %v1303 = vsel %vm1296, %v1293, -inf
        %1304 = vmax.xlane.f32.xlu0 %v1303
        %v1305 = vpop.xlane.xlu0 %1304
        %v1306 = vsel %vm1296, %v1294, -inf
        %1307 = vmax.xlane.f32.xlu0 %v1306
        %v1308 = vpop.xlane.xlu0 %1307
        %v1309 = vsel %vm1296, %v1295, -inf
        %1310 = vmax.xlane.f32.xlu0 %v1309
        %v1311 = vpop.xlane.xlu0 %1310
        %v1312 = vsub.f32 %v1291, %v1299
        %v1313 = vsub.f32 %v1292, %v1302
        %v1314 = vsub.f32 %v1293, %v1305
        %v1315 = vsub.f32 %v1294, %v1308
        %v1316 = vsub.f32 %v1295, %v1311
        %v1317 = vmul.f32 %v1312, 1.442695
        %v1318 = vpow.pop %v1317
        %v1319 = vmul.f32 %v1313, 1.442695
        %v1320 = vpow.pop %v1319
        %v1321 = vmul.f32 %v1314, 1.442695
        %v1322 = vpow.pop %v1321
        %v1323 = vmul.f32 %v1315, 1.442695
        %v1324 = vpow.pop %v1323
        %v1325 = vmul.f32 %v1316, 1.442695
        %v1326 = vpow.pop %v1325
        %v1327 = vsel %vm1296, %v1318, 0.0
        %1328 = vadd.xlane.f32.xlu0 %v1327
        %v1329 = vpop.xlane.xlu0 %1328
        %v1330 = vsel %vm1296, %v1320, 0.0
        %1331 = vadd.xlane.f32.xlu0 %v1330
        %v1332 = vpop.xlane.xlu0 %1331
        %v1333 = vsel %vm1296, %v1322, 0.0
        %1334 = vadd.xlane.f32.xlu0 %v1333
        %v1335 = vpop.xlane.xlu0 %1334
        %v1336 = vsel %vm1296, %v1324, 0.0
        %1337 = vadd.xlane.f32.xlu0 %v1336
        %v1338 = vpop.xlane.xlu0 %1337
        %v1339 = vsel %vm1296, %v1326, 0.0
        %1340 = vadd.xlane.f32.xlu0 %v1339
        %v1341 = vpop.xlane.xlu0 %1340
        %v1342 = vrcp.pop %v1329
        %v1343 = vrcp.pop %v1332
        %v1344 = vrcp.pop %v1335
        %v1345 = vrcp.pop %v1338
        %v1346 = vrcp.pop %v1341
        %v1347 = vmul.f32 %v1318, %v1342
        %v1348 = vmul.f32 %v1320, %v1343
        %v1349 = vmul.f32 %v1322, %v1344
        %v1350 = vmul.f32 %v1324, %v1345
        %v1351 = vmul.f32 %v1326, %v1346
        %1352 = vrot.lane.b32.xlu0 %v1210, 112
        %v1353 = vpop.permute.xlu0 %1352
        %1354 = vrot.lane.b32.xlu0 %v1213, 112
        %v1355 = vpop.permute.xlu0 %1354
        %1356 = vrot.lane.b32.xlu0 %v1216, 112
        %v1357 = vpop.permute.xlu0 %1356
        %1358 = vrot.lane.b32.xlu0 %v1219, 112
        %v1359 = vpop.permute.xlu0 %1358
        %1360 = vrot.lane.b32.xlu0 %v1222, 112
        %v1361 = vpop.permute.xlu0 %1360
        %v1368 = vsel %vm1296, %v1347, 0
        %v1371 = vsel %vm1296, %v1348, 0
        %v1374 = vsel %vm1296, %v1349, 0
        %v1377 = vsel %vm1296, %v1350, 0
        %v1380 = vsel %vm1296, %v1351, 0
        %1382 = vmatpush.msra.mxu0 0.0
        %1383 = vmatpush.msra.mxu0 0.0
        %1384 = vmatpush.msra.mxu0 0.0
        %1385 = vmatpush.msra.mxu0 0.0
        %1386 = vmatpush.msra.mxu0 0.0
        %1387 = vmatpush.msra.mxu0 0.0
        %1388 = vmatpush.msra.mxu0 0.0
        %1389 = vmatpush.msra.mxu0 0.0
        %1390 = vmatpush.msra.mxu0 0.0
        %1391 = vmatpush.msra.mxu0 0.0
        %1392 = vmatpush.msra.mxu0 0.0
        %1393 = vmatpush.msra.mxu0 %v1361
        %1394 = vmatpush.msra.mxu0 %v1359
        %1395 = vmatpush.msra.mxu0 %v1357
        %1396 = vmatpush.msra.mxu0 %v1355
        %1397 = vmatpush.msra.mxu0 %v1353
        %1398 = vmatmul.f32.gmra.mxu0 %v1368
        %v1399 = vpop.f32.mrf.mxu0
        %v1400 = vadd.f32 0.0, %v1399
        %1401 = vmatmul.f32.gmra.mxu0 %v1371
        %v1402 = vpop.f32.mrf.mxu0
        %v1403 = vadd.f32 0.0, %v1402
        %1404 = vmatmul.f32.gmra.mxu0 %v1374
        %v1405 = vpop.f32.mrf.mxu0
        %v1406 = vadd.f32 0.0, %v1405
        %1407 = vmatmul.f32.gmra.mxu0 %v1377
        %v1408 = vpop.f32.mrf.mxu0
        %v1409 = vadd.f32 0.0, %v1408
        %1410 = vmatmul.f32.gmra.mxu0 %v1380
        %v1411 = vpop.f32.mrf.mxu0
        %v1412 = vadd.f32 0.0, %v1411
        %1413 = vdwg.mxu0
        %v1414 = vld [vmem:[%s11] sm:$0xff]
        %v1415 = vld [vmem:[%s12] sm:$0x1]
        %v1417 = vperm.slane %v1415, 0
        %v1420 = vsel %vm935, %v1400, 0
        %v1423 = vsel %vm935, %v1403, 0
        %v1426 = vsel %vm935, %v1406, 0
        %v1429 = vsel %vm935, %v1409, 0
        %v1432 = vsel %vm935, %v1412, 0
        %1434 = vmatpush.msra.mxu0 0.0
        %1435 = vmatpush.msra.mxu0 0.0
        %1436 = vmatpush.msra.mxu0 0.0
        %1437 = vmatpush.msra.mxu0 0.0
        %1438 = vmatpush.msra.mxu0 0.0
        %1439 = vmatpush.msra.mxu0 0.0
        %1440 = vmatpush.msra.mxu0 0.0
        %1441 = vmatpush.msra.mxu0 0.0
        %1442 = vmatpush.msra.mxu0 0.0
        %1443 = vmatpush.msra.mxu0 0.0
        %1444 = vmatpush.msra.mxu0 0.0
        %1445 = vmatpush.msra.mxu0 0.0
        %1446 = vmatpush.msra.mxu0 0.0
        %1447 = vmatpush.msra.mxu0 0.0
        %1448 = vmatpush.msra.mxu0 0.0
        %1449 = vmatpush.msra.mxu0 %v1414
        %1450 = vmatmul.f32.gmra.mxu0 %v1420
        %v1451 = vpop.f32.mrf.mxu0
        %v1452 = vadd.f32 %v1417, %v1451
        %1453 = vmatmul.f32.gmra.mxu0 %v1423
        %v1454 = vpop.f32.mrf.mxu0
        %v1455 = vadd.f32 %v1417, %v1454
        %1456 = vmatmul.f32.gmra.mxu0 %v1426
        %v1457 = vpop.f32.mrf.mxu0
        %v1458 = vadd.f32 %v1417, %v1457
        %1459 = vmatmul.f32.gmra.mxu0 %v1429
        %v1460 = vpop.f32.mrf.mxu0
        %v1461 = vadd.f32 %v1417, %v1460
        %1462 = vmatmul.f32.gmra.mxu0 %v1432
        %v1463 = vpop.f32.mrf.mxu0
        %v1464 = vadd.f32 %v1417, %v1463
        %1465 = vdwg.mxu0
        %v1466 = vadd.f32 %v1027, %v1452
        %v1467 = vadd.f32 %v1032, %v1455
        %v1468 = vadd.f32 %v1033, %v1458
        %v1469 = vadd.f32 %v1034, %v1461
        %v1470 = vadd.f32 %v1035, %v1464
        %v1471 = vld [vmem:[%s13] sm:$0x1]
        %v1472 = vld [vmem:[%s14] sm:$0x1]
        %v1473 = vsel %vm977, %v1466, 0.0
        %1474 = vadd.xlane.f32.xlu0 %v1473
        %v1475 = vpop.xlane.xlu0 %1474
        %v1476 = vsel %vm977, %v1467, 0.0
        %1477 = vadd.xlane.f32.xlu0 %v1476
        %v1478 = vpop.xlane.xlu0 %1477
        %v1479 = vsel %vm977, %v1468, 0.0
        %1480 = vadd.xlane.f32.xlu0 %v1479
        %v1481 = vpop.xlane.xlu0 %1480
        %v1482 = vsel %vm977, %v1469, 0.0
        %1483 = vadd.xlane.f32.xlu0 %v1482
        %v1484 = vpop.xlane.xlu0 %1483
        %v1485 = vsel %vm977, %v1470, 0.0
        %1486 = vadd.xlane.f32.xlu0 %v1485
        %v1487 = vpop.xlane.xlu0 %1486
        %v1488 = vmul.f32 %v1475, %v1059
        %v1489 = vmul.f32 %v1478, %v1059
        %v1490 = vmul.f32 %v1481, %v1059
        %v1491 = vmul.f32 %v1484, %v1059
        %v1492 = vmul.f32 %v1487, %v1059
        %v1493 = vsub.f32 %v1466, %v1488
        %v1494 = vsub.f32 %v1467, %v1489
        %v1495 = vsub.f32 %v1468, %v1490
        %v1496 = vsub.f32 %v1469, %v1491
        %v1497 = vsub.f32 %v1470, %v1492
        %v1498 = vmul.f32 %v1493, %v1493
        %v1499 = vmul.f32 %v1494, %v1494
        %v1500 = vmul.f32 %v1495, %v1495
        %v1501 = vmul.f32 %v1496, %v1496
        %v1502 = vmul.f32 %v1497, %v1497
        %v1503 = vsel %vm977, %v1498, 0.0
        %1504 = vadd.xlane.f32.xlu0 %v1503
        %v1505 = vpop.xlane.xlu0 %1504
        %v1506 = vsel %vm977, %v1499, 0.0
        %1507 = vadd.xlane.f32.xlu0 %v1506
        %v1508 = vpop.xlane.xlu0 %1507
        %v1509 = vsel %vm977, %v1500, 0.0
        %1510 = vadd.xlane.f32.xlu0 %v1509
        %v1511 = vpop.xlane.xlu0 %1510
        %v1512 = vsel %vm977, %v1501, 0.0
        %1513 = vadd.xlane.f32.xlu0 %v1512
        %v1514 = vpop.xlane.xlu0 %1513
        %v1515 = vsel %vm977, %v1502, 0.0
        %1516 = vadd.xlane.f32.xlu0 %v1515
        %v1517 = vpop.xlane.xlu0 %1516
        %v1518 = vmul.f32 %v1505, %v1059
        %v1519 = vmul.f32 %v1508, %v1059
        %v1520 = vmul.f32 %v1511, %v1059
        %v1521 = vmul.f32 %v1514, %v1059
        %v1522 = vmul.f32 %v1517, %v1059
        %v1523 = vadd.f32 %v1518, 1e-05
        %v1524 = vadd.f32 %v1519, 1e-05
        %v1525 = vadd.f32 %v1520, 1e-05
        %v1526 = vadd.f32 %v1521, 1e-05
        %v1527 = vadd.f32 %v1522, 1e-05
        %v1528 = vrsqrt.pop %v1523
        %v1529 = vmul.f32 %v1528, %v1523
        %v1530 = vmul.f32 %v1529, %v1528
        %v1531 = vmul.f32 0.5, %v1530
        %v1532 = vsub.f32 1.5, %v1531
        %v1533 = vmul.f32 %v1528, %v1532
        %vm1534 = vweird.f32 %v1523
        %vm1535 = vweird.f32 %v1528
        %vm1536 = vmor %vm1534, %vm1535
        %v1537 = vsel %vm1536, %v1528, %v1533
        %v1538 = vrsqrt.pop %v1524
        %v1539 = vmul.f32 %v1538, %v1524
        %v1540 = vmul.f32 %v1539, %v1538
        %v1541 = vmul.f32 0.5, %v1540
        %v1542 = vsub.f32 1.5, %v1541
        %v1543 = vmul.f32 %v1538, %v1542
        %vm1544 = vweird.f32 %v1524
        %vm1545 = vweird.f32 %v1538
        %vm1546 = vmor %vm1544, %vm1545
        %v1547 = vsel %vm1546, %v1538, %v1543
        %v1548 = vrsqrt.pop %v1525
        %v1549 = vmul.f32 %v1548, %v1525
        %v1550 = vmul.f32 %v1549, %v1548
        %v1551 = vmul.f32 0.5, %v1550
        %v1552 = vsub.f32 1.5, %v1551
        %v1553 = vmul.f32 %v1548, %v1552
        %vm1554 = vweird.f32 %v1525
        %vm1555 = vweird.f32 %v1548
        %vm1556 = vmor %vm1554, %vm1555
        %v1557 = vsel %vm1556, %v1548, %v1553
        %v1558 = vrsqrt.pop %v1526
        %v1559 = vmul.f32 %v1558, %v1526
        %v1560 = vmul.f32 %v1559, %v1558
        %v1561 = vmul.f32 0.5, %v1560
        %v1562 = vsub.f32 1.5, %v1561
        %v1563 = vmul.f32 %v1558, %v1562
        %vm1564 = vweird.f32 %v1526
        %vm1565 = vweird.f32 %v1558
        %vm1566 = vmor %vm1564, %vm1565
        %v1567 = vsel %vm1566, %v1558, %v1563
        %v1568 = vrsqrt.pop %v1527
        %v1569 = vmul.f32 %v1568, %v1527
        %v1570 = vmul.f32 %v1569, %v1568
        %v1571 = vmul.f32 0.5, %v1570
        %v1572 = vsub.f32 1.5, %v1571
        %v1573 = vmul.f32 %v1568, %v1572
        %vm1574 = vweird.f32 %v1527
        %vm1575 = vweird.f32 %v1568
        %vm1576 = vmor %vm1574, %vm1575
        %v1577 = vsel %vm1576, %v1568, %v1573
        %v1578 = vmul.f32 %v1493, %v1537
        %v1579 = vmul.f32 %v1494, %v1547
        %v1580 = vmul.f32 %v1495, %v1557
        %v1581 = vmul.f32 %v1496, %v1567
        %v1582 = vmul.f32 %v1497, %v1577
        %v1584 = vperm.slane %v1471, 0
        %v1586 = vmul.f32 %v1578, %v1584
        %v1587 = vmul.f32 %v1579, %v1584
        %v1588 = vmul.f32 %v1580, %v1584
        %v1589 = vmul.f32 %v1581, %v1584
        %v1590 = vmul.f32 %v1582, %v1584
        %v1592 = vperm.slane %v1472, 0
        %v1594 = vadd.f32 %v1586, %v1592
        %v1595 = vadd.f32 %v1587, %v1592
        %v1596 = vadd.f32 %v1588, %v1592
        %v1597 = vadd.f32 %v1589, %v1592
        %v1598 = vadd.f32 %v1590, %v1592
        %v1599 = vld [vmem:[%s15] sm:$0xff]
        %v1600 = vld [vmem:[%s15 + $0x8] sm:$0xff]
        %v1601 = vld [vmem:[%s16] sm:$0x1]
        %v1603 = vperm.slane %v1601, 0
        %v1606 = vsel %vm977, %v1594, 0
        %v1609 = vsel %vm977, %v1595, 0
        %v1612 = vsel %vm977, %v1596, 0
        %v1615 = vsel %vm977, %v1597, 0
        %v1618 = vsel %vm977, %v1598, 0
        %1620 = vmatpush.msra.mxu0 0.0
        %1621 = vmatpush.msra.mxu0 0.0
        %1622 = vmatpush.msra.mxu0 0.0
        %1623 = vmatpush.msra.mxu0 0.0
        %1624 = vmatpush.msra.mxu0 0.0
        %1625 = vmatpush.msra.mxu0 0.0
        %1626 = vmatpush.msra.mxu0 0.0
        %1627 = vmatpush.msra.mxu0 0.0
        %1628 = vmatpush.msra.mxu0 0.0
        %1629 = vmatpush.msra.mxu0 0.0
        %1630 = vmatpush.msra.mxu0 0.0
        %1631 = vmatpush.msra.mxu0 0.0
        %1632 = vmatpush.msra.mxu0 0.0
        %1633 = vmatpush.msra.mxu0 0.0
        %1634 = vmatpush.msra.mxu0 %v1600
        %1635 = vmatpush.msra.mxu0 %v1599
        %1636 = vmatmul.f32.gmra.mxu0 %v1606
        %v1637 = vpop.f32.mrf.mxu0
        %v1638 = vadd.f32 %v1603, %v1637
        %1639 = vmatmul.f32.gmra.mxu0 %v1609
        %v1640 = vpop.f32.mrf.mxu0
        %v1641 = vadd.f32 %v1603, %v1640
        %1642 = vmatmul.f32.gmra.mxu0 %v1612
        %v1643 = vpop.f32.mrf.mxu0
        %v1644 = vadd.f32 %v1603, %v1643
        %1645 = vmatmul.f32.gmra.mxu0 %v1615
        %v1646 = vpop.f32.mrf.mxu0
        %v1647 = vadd.f32 %v1603, %v1646
        %1648 = vmatmul.f32.gmra.mxu0 %v1618
        %v1649 = vpop.f32.mrf.mxu0
        %v1650 = vadd.f32 %v1603, %v1649
        %1651 = vdwg.mxu0
        %v1652 = vmul.f32 %v1638, %v1638
        %v1653 = vmul.f32 %v1641, %v1641
        %v1654 = vmul.f32 %v1644, %v1644
        %v1655 = vmul.f32 %v1647, %v1647
        %v1656 = vmul.f32 %v1650, %v1650
        %v1657 = vmul.f32 %v1638, %v1652
        %v1658 = vmul.f32 %v1641, %v1653
        %v1659 = vmul.f32 %v1644, %v1654
        %v1660 = vmul.f32 %v1647, %v1655
        %v1661 = vmul.f32 %v1650, %v1656
        %v1662 = vmul.f32 %v1657, 0.044715
        %v1663 = vmul.f32 %v1658, 0.044715
        %v1664 = vmul.f32 %v1659, 0.044715
        %v1665 = vmul.f32 %v1660, 0.044715
        %v1666 = vmul.f32 %v1661, 0.044715
        %v1667 = vadd.f32 %v1638, %v1662
        %v1668 = vadd.f32 %v1641, %v1663
        %v1669 = vadd.f32 %v1644, %v1664
        %v1670 = vadd.f32 %v1647, %v1665
        %v1671 = vadd.f32 %v1650, %v1666
        %v1672 = vmul.f32 %v1667, 0.7978846
        %v1673 = vmul.f32 %v1668, 0.7978846
        %v1674 = vmul.f32 %v1669, 0.7978846
        %v1675 = vmul.f32 %v1670, 0.7978846
        %v1676 = vmul.f32 %v1671, 0.7978846
        %v1677 = vtanh.pop %v1672
        %v1678 = vtanh.pop %v1673
        %v1679 = vtanh.pop %v1674
        %v1680 = vtanh.pop %v1675
        %v1681 = vtanh.pop %v1676
        %v1682 = vadd.f32 %v1677, 1.0
        %v1683 = vadd.f32 %v1678, 1.0
        %v1684 = vadd.f32 %v1679, 1.0
        %v1685 = vadd.f32 %v1680, 1.0
        %v1686 = vadd.f32 %v1681, 1.0
        %v1687 = vmul.f32 %v1682, 0.5
        %v1688 = vmul.f32 %v1683, 0.5
        %v1689 = vmul.f32 %v1684, 0.5
        %v1690 = vmul.f32 %v1685, 0.5
        %v1691 = vmul.f32 %v1686, 0.5
        %v1692 = vmul.f32 %v1638, %v1687
        %v1693 = vmul.f32 %v1641, %v1688
        %v1694 = vmul.f32 %v1644, %v1689
        %v1695 = vmul.f32 %v1647, %v1690
        %v1696 = vmul.f32 %v1650, %v1691
        %v1697 = vld [vmem:[%s17] sm:$0xff]
        %v1698 = vld [vmem:[%s17 + $0x8] sm:$0xff]
        %v1699 = vld [vmem:[%s17 + $0x10] sm:$0xff]
        %v1700 = vld [vmem:[%s17 + $0x18] sm:$0xff]
        %v1701 = vld [vmem:[%s17 + $0x20] sm:$0xff]
        %v1702 = vld [vmem:[%s17 + $0x28] sm:$0xff]
        %v1703 = vld [vmem:[%s17 + $0x30] sm:$0xff]
        %v1704 = vld [vmem:[%s17 + $0x38] sm:$0xff]
        %v1705 = vld [vmem:[%s18] sm:$0x1]
        %v1707 = vperm.slane %v1705, 0
        %vm1709 = vcmask 523264
        %v1711 = vsel %vm1709, %v1692, 0
        %v1714 = vsel %vm1709, %v1693, 0
        %v1717 = vsel %vm1709, %v1694, 0
        %v1720 = vsel %vm1709, %v1695, 0
        %v1723 = vsel %vm1709, %v1696, 0
        %1725 = vmatpush.msra.mxu0 0.0
        %1726 = vmatpush.msra.mxu0 0.0
        %1727 = vmatpush.msra.mxu0 0.0
        %1728 = vmatpush.msra.mxu0 0.0
        %1729 = vmatpush.msra.mxu0 0.0
        %1730 = vmatpush.msra.mxu0 0.0
        %1731 = vmatpush.msra.mxu0 0.0
        %1732 = vmatpush.msra.mxu0 0.0
        %1733 = vmatpush.msra.mxu0 %v1704
        %1734 = vmatpush.msra.mxu0 %v1703
        %1735 = vmatpush.msra.mxu0 %v1702
        %1736 = vmatpush.msra.mxu0 %v1701
        %1737 = vmatpush.msra.mxu0 %v1700
        %1738 = vmatpush.msra.mxu0 %v1699
        %1739 = vmatpush.msra.mxu0 %v1698
        %1740 = vmatpush.msra.mxu0 %v1697
        %1741 = vmatmul.f32.gmra.mxu0 %v1711
        %v1742 = vpop.f32.mrf.mxu0
        %v1743 = vadd.f32 %v1707, %v1742
        %1744 = vmatmul.f32.gmra.mxu0 %v1714
        %v1745 = vpop.f32.mrf.mxu0
        %v1746 = vadd.f32 %v1707, %v1745
        %1747 = vmatmul.f32.gmra.mxu0 %v1717
        %v1748 = vpop.f32.mrf.mxu0
        %v1749 = vadd.f32 %v1707, %v1748
        %1750 = vmatmul.f32.gmra.mxu0 %v1720
        %v1751 = vpop.f32.mrf.mxu0
        %v1752 = vadd.f32 %v1707, %v1751
        %1753 = vmatmul.f32.gmra.mxu0 %v1723
        %v1754 = vpop.f32.mrf.mxu0
        %v1755 = vadd.f32 %v1707, %v1754
        %1756 = vdwg.mxu0
        %v1757 = vadd.f32 %v1466, %v1743
        %v1758 = vadd.f32 %v1467, %v1746
        %v1759 = vadd.f32 %v1468, %v1749
        %v1760 = vadd.f32 %v1469, %v1752
        %v1761 = vadd.f32 %v1470, %v1755
        %v1762 = vld [vmem:[%s19] sm:$0x1]
        %v1763 = vld [vmem:[%s20] sm:$0x1]
        %v1764 = vsel %vm977, %v1757, 0.0
        %1765 = vadd.xlane.f32.xlu0 %v1764
        %v1766 = vpop.xlane.xlu0 %1765
        %v1767 = vsel %vm977, %v1758, 0.0
        %1768 = vadd.xlane.f32.xlu0 %v1767
        %v1769 = vpop.xlane.xlu0 %1768
        %v1770 = vsel %vm977, %v1759, 0.0
        %1771 = vadd.xlane.f32.xlu0 %v1770
        %v1772 = vpop.xlane.xlu0 %1771
        %v1773 = vsel %vm977, %v1760, 0.0
        %1774 = vadd.xlane.f32.xlu0 %v1773
        %v1775 = vpop.xlane.xlu0 %1774
        %v1776 = vsel %vm977, %v1761, 0.0
        %1777 = vadd.xlane.f32.xlu0 %v1776
        %v1778 = vpop.xlane.xlu0 %1777
        %v1779 = vmul.f32 %v1766, %v1059
        %v1780 = vmul.f32 %v1769, %v1059
        %v1781 = vmul.f32 %v1772, %v1059
        %v1782 = vmul.f32 %v1775, %v1059
        %v1783 = vmul.f32 %v1778, %v1059
        %v1784 = vsub.f32 %v1757, %v1779
        %v1785 = vsub.f32 %v1758, %v1780
        %v1786 = vsub.f32 %v1759, %v1781
        %v1787 = vsub.f32 %v1760, %v1782
        %v1788 = vsub.f32 %v1761, %v1783
        %v1789 = vmul.f32 %v1784, %v1784
        %v1790 = vmul.f32 %v1785, %v1785
        %v1791 = vmul.f32 %v1786, %v1786
        %v1792 = vmul.f32 %v1787, %v1787
        %v1793 = vmul.f32 %v1788, %v1788
        %v1794 = vsel %vm977, %v1789, 0.0
        %1795 = vadd.xlane.f32.xlu0 %v1794
        %v1796 = vpop.xlane.xlu0 %1795
        %v1797 = vsel %vm977, %v1790, 0.0
        %1798 = vadd.xlane.f32.xlu0 %v1797
        %v1799 = vpop.xlane.xlu0 %1798
        %v1800 = vsel %vm977, %v1791, 0.0
        %1801 = vadd.xlane.f32.xlu0 %v1800
        %v1802 = vpop.xlane.xlu0 %1801
        %v1803 = vsel %vm977, %v1792, 0.0
        %1804 = vadd.xlane.f32.xlu0 %v1803
        %v1805 = vpop.xlane.xlu0 %1804
        %v1806 = vsel %vm977, %v1793, 0.0
        %1807 = vadd.xlane.f32.xlu0 %v1806
        %v1808 = vpop.xlane.xlu0 %1807
        %v1809 = vmul.f32 %v1796, %v1059
        %v1810 = vmul.f32 %v1799, %v1059
        %v1811 = vmul.f32 %v1802, %v1059
        %v1812 = vmul.f32 %v1805, %v1059
        %v1813 = vmul.f32 %v1808, %v1059
        %v1814 = vadd.f32 %v1809, 1e-05
        %v1815 = vadd.f32 %v1810, 1e-05
        %v1816 = vadd.f32 %v1811, 1e-05
        %v1817 = vadd.f32 %v1812, 1e-05
        %v1818 = vadd.f32 %v1813, 1e-05
        %v1819 = vrsqrt.pop %v1814
        %v1820 = vmul.f32 %v1819, %v1814
        %v1821 = vmul.f32 %v1820, %v1819
        %v1822 = vmul.f32 0.5, %v1821
        %v1823 = vsub.f32 1.5, %v1822
        %v1824 = vmul.f32 %v1819, %v1823
        %vm1825 = vweird.f32 %v1814
        %vm1826 = vweird.f32 %v1819
        %vm1827 = vmor %vm1825, %vm1826
        %v1828 = vsel %vm1827, %v1819, %v1824
        %v1829 = vrsqrt.pop %v1815
        %v1830 = vmul.f32 %v1829, %v1815
        %v1831 = vmul.f32 %v1830, %v1829
        %v1832 = vmul.f32 0.5, %v1831
        %v1833 = vsub.f32 1.5, %v1832
        %v1834 = vmul.f32 %v1829, %v1833
        %vm1835 = vweird.f32 %v1815
        %vm1836 = vweird.f32 %v1829
        %vm1837 = vmor %vm1835, %vm1836
        %v1838 = vsel %vm1837, %v1829, %v1834
        %v1839 = vrsqrt.pop %v1816
        %v1840 = vmul.f32 %v1839, %v1816
        %v1841 = vmul.f32 %v1840, %v1839
        %v1842 = vmul.f32 0.5, %v1841
        %v1843 = vsub.f32 1.5, %v1842
        %v1844 = vmul.f32 %v1839, %v1843
        %vm1845 = vweird.f32 %v1816
        %vm1846 = vweird.f32 %v1839
        %vm1847 = vmor %vm1845, %vm1846
        %v1848 = vsel %vm1847, %v1839, %v1844
        %v1849 = vrsqrt.pop %v1817
        %v1850 = vmul.f32 %v1849, %v1817
        %v1851 = vmul.f32 %v1850, %v1849
        %v1852 = vmul.f32 0.5, %v1851
        %v1853 = vsub.f32 1.5, %v1852
        %v1854 = vmul.f32 %v1849, %v1853
        %vm1855 = vweird.f32 %v1817
        %vm1856 = vweird.f32 %v1849
        %vm1857 = vmor %vm1855, %vm1856
        %v1858 = vsel %vm1857, %v1849, %v1854
        %v1859 = vrsqrt.pop %v1818
        %v1860 = vmul.f32 %v1859, %v1818
        %v1861 = vmul.f32 %v1860, %v1859
        %v1862 = vmul.f32 0.5, %v1861
        %v1863 = vsub.f32 1.5, %v1862
        %v1864 = vmul.f32 %v1859, %v1863
        %vm1865 = vweird.f32 %v1818
        %vm1866 = vweird.f32 %v1859
        %vm1867 = vmor %vm1865, %vm1866
        %v1868 = vsel %vm1867, %v1859, %v1864
        %v1869 = vmul.f32 %v1784, %v1828
        %v1870 = vmul.f32 %v1785, %v1838
        %v1871 = vmul.f32 %v1786, %v1848
        %v1872 = vmul.f32 %v1787, %v1858
        %v1873 = vmul.f32 %v1788, %v1868
        %v1875 = vperm.slane %v1762, 0
        %v1877 = vmul.f32 %v1869, %v1875
        %v1878 = vmul.f32 %v1870, %v1875
        %v1879 = vmul.f32 %v1871, %v1875
        %v1880 = vmul.f32 %v1872, %v1875
        %v1881 = vmul.f32 %v1873, %v1875
        %v1883 = vperm.slane %v1763, 0
        %v1885 = vadd.f32 %v1877, %v1883
        %v1886 = vadd.f32 %v1878, %v1883
        %v1887 = vadd.f32 %v1879, %v1883
        %v1888 = vadd.f32 %v1880, %v1883
        %v1889 = vadd.f32 %v1881, %v1883
        %v1890 = vld [vmem:[%s21] sm:$0xff]
        %v1891 = vld [vmem:[%s21 + $0x8] sm:$0xff]
        %v1892 = vld [vmem:[%s21 + $0x10] sm:$0xff]
        %v1893 = vld [vmem:[%s21 + $0x18] sm:$0xff]
        %v1894 = vld [vmem:[%s21 + $0x20] sm:$0xff]
        %v1895 = vld [vmem:[%s21 + $0x28] sm:$0xff]
        %v1896 = vld [vmem:[%s21 + $0x30] sm:$0xff]
        %v1897 = vld [vmem:[%s21 + $0x38] sm:$0xff]
        %v1898 = vld [vmem:[%s22] sm:$0xff]
        %v1899 = vld [vmem:[%s22 + $0x8] sm:$0xff]
        %v1900 = vld [vmem:[%s22 + $0x10] sm:$0xff]
        %v1901 = vld [vmem:[%s22 + $0x18] sm:$0xff]
        %v1902 = vld [vmem:[%s22 + $0x20] sm:$0xff]
        %v1903 = vld [vmem:[%s22 + $0x28] sm:$0xff]
        %v1904 = vld [vmem:[%s22 + $0x30] sm:$0xff]
        %v1905 = vld [vmem:[%s22 + $0x38] sm:$0xff]
        %1907 = vset.pattern.permute.xlu0 0
        %1908 = vperm.xlu0 %1907, %v1898
        %v1909 = vpop.permute.xlu0 %1908
        %1912 = vset.pattern.permute.xlu0 0
        %1913 = vperm.xlu0 %1912, %v1899
        %v1914 = vpop.permute.xlu0 %1913
        %1917 = vset.pattern.permute.xlu0 0
        %1918 = vperm.xlu0 %1917, %v1900
        %v1919 = vpop.permute.xlu0 %1918
        %1922 = vset.pattern.permute.xlu0 0
        %1923 = vperm.xlu0 %1922, %v1901
        %v1924 = vpop.permute.xlu0 %1923
        %1927 = vset.pattern.permute.xlu0 0
        %1928 = vperm.xlu0 %1927, %v1902
        %v1929 = vpop.permute.xlu0 %1928
        %1932 = vset.pattern.permute.xlu0 0
        %1933 = vperm.xlu0 %1932, %v1903
        %v1934 = vpop.permute.xlu0 %1933
        %1937 = vset.pattern.permute.xlu0 0
        %1938 = vperm.xlu0 %1937, %v1904
        %v1939 = vpop.permute.xlu0 %1938
        %1942 = vset.pattern.permute.xlu0 0
        %1943 = vperm.xlu0 %1942, %v1905
        %v1944 = vpop.permute.xlu0 %1943
        %v1947 = vsel %vm977, %v1890, 0
        %v1950 = vsel %vm977, %v1891, 0
        %v1953 = vsel %vm977, %v1892, 0
        %v1956 = vsel %vm977, %v1893, 0
        %v1959 = vsel %vm977, %v1894, 0
        %v1962 = vsel %vm977, %v1895, 0
        %v1965 = vsel %vm977, %v1896, 0
        %v1968 = vsel %vm977, %v1897, 0
        %v1971 = vsel %vm977, %v1885, 0
        %v1974 = vsel %vm977, %v1886, 0
        %v1977 = vsel %vm977, %v1887, 0
        %v1980 = vsel %vm977, %v1888, 0
        %v1983 = vsel %vm977, %v1889, 0
        %1985 = vmatpush.xpose.msra.mxu0 0.0
        %1986 = vmatpush.xpose.msra.mxu0 0.0
        %1987 = vmatpush.xpose.msra.mxu0 0.0
        %1988 = vmatpush.xpose.msra.mxu0 0.0
        %1989 = vmatpush.xpose.msra.mxu0 0.0
        %1990 = vmatpush.xpose.msra.mxu0 0.0
        %1991 = vmatpush.xpose.msra.mxu0 0.0
        %1992 = vmatpush.xpose.msra.mxu0 0.0
        %1993 = vmatpush.xpose.msra.mxu0 0.0
        %1994 = vmatpush.xpose.msra.mxu0 0.0
        %1995 = vmatpush.xpose.msra.mxu0 0.0
        %1996 = vmatpush.xpose.msra.mxu0 %v1983
        %1997 = vmatpush.xpose.msra.mxu0 %v1980
        %1998 = vmatpush.xpose.msra.mxu0 %v1977
        %1999 = vmatpush.xpose.msra.mxu0 %v1974
        %2000 = vmatpush.xpose.msra.mxu0 %v1971
        %2001 = vmatmul.f32.gmra.mxu0 %v1947
        %v2002 = vpop.f32.mrf.mxu0
        %v2003 = vadd.f32 %v1909, %v2002
        %2004 = vmatmul.f32.gmra.mxu0 %v1950
        %v2005 = vpop.f32.mrf.mxu0
        %v2006 = vadd.f32 %v1914, %v2005
        %2007 = vmatmul.f32.gmra.mxu0 %v1953
        %v2008 = vpop.f32.mrf.mxu0
        %v2009 = vadd.f32 %v1919, %v2008
        %2010 = vmatmul.f32.gmra.mxu0 %v1956
        %v2011 = vpop.f32.mrf.mxu0
        %v2012 = vadd.f32 %v1924, %v2011
        %2013 = vmatmul.f32.gmra.mxu0 %v1959
        %v2014 = vpop.f32.mrf.mxu0
        %v2015 = vadd.f32 %v1929, %v2014
        %2016 = vmatmul.f32.gmra.mxu0 %v1962
        %v2017 = vpop.f32.mrf.mxu0
        %v2018 = vadd.f32 %v1934, %v2017
        %2019 = vmatmul.f32.gmra.mxu0 %v1965
        %v2020 = vpop.f32.mrf.mxu0
        %v2021 = vadd.f32 %v1939, %v2020
        %2022 = vmatmul.f32.gmra.mxu0 %v1968
        %v2023 = vpop.f32.mrf.mxu0
        %v2024 = vadd.f32 %v1944, %v2023
        %2025 = vdwg.mxu0
        %v2026 = vld [vmem:[%s23] sm:$0x1]
        %v2027 = vld [vmem:[%s24] sm:$0x1]
        %v2028 = vsel %vm1296, %v2003, 0.0
        %2029 = vadd.xlane.f32.xlu0 %v2028
        %v2030 = vpop.xlane.xlu0 %2029
        %v2031 = vsel %vm1296, %v2006, 0.0
        %2032 = vadd.xlane.f32.xlu0 %v2031
        %v2033 = vpop.xlane.xlu0 %2032
        %v2034 = vsel %vm1296, %v2009, 0.0
        %2035 = vadd.xlane.f32.xlu0 %v2034
        %v2036 = vpop.xlane.xlu0 %2035
        %v2037 = vsel %vm1296, %v2012, 0.0
        %2038 = vadd.xlane.f32.xlu0 %v2037
        %v2039 = vpop.xlane.xlu0 %2038
        %v2040 = vsel %vm1296, %v2015, 0.0
        %2041 = vadd.xlane.f32.xlu0 %v2040
        %v2042 = vpop.xlane.xlu0 %2041
        %v2043 = vsel %vm1296, %v2018, 0.0
        %2044 = vadd.xlane.f32.xlu0 %v2043
        %v2045 = vpop.xlane.xlu0 %2044
        %v2046 = vsel %vm1296, %v2021, 0.0
        %2047 = vadd.xlane.f32.xlu0 %v2046
        %v2048 = vpop.xlane.xlu0 %2047
        %v2049 = vsel %vm1296, %v2024, 0.0
        %2050 = vadd.xlane.f32.xlu0 %v2049
        %v2051 = vpop.xlane.xlu0 %2050
        %v2052 = vrcp.pop 40.0
        %v2053 = vmul.f32 40.0, %v2052
        %v2054 = vsub.f32 1.0, %v2053
        %v2055 = vmul.f32 %v2052, %v2054
        %v2056 = vadd.f32 %v2052, %v2055
        %vm2057 = vweird.f32 %v2052
        %v2058 = vsel %vm2057, %v2052, %v2056
        %v2059 = vmul.f32 %v2030, %v2058
        %v2060 = vmul.f32 %v2033, %v2058
        %v2061 = vmul.f32 %v2036, %v2058
        %v2062 = vmul.f32 %v2039, %v2058
        %v2063 = vmul.f32 %v2042, %v2058
        %v2064 = vmul.f32 %v2045, %v2058
        %v2065 = vmul.f32 %v2048, %v2058
        %v2066 = vmul.f32 %v2051, %v2058
        %v2067 = vsub.f32 %v2003, %v2059
        %v2068 = vsub.f32 %v2006, %v2060
        %v2069 = vsub.f32 %v2009, %v2061
        %v2070 = vsub.f32 %v2012, %v2062
        %v2071 = vsub.f32 %v2015, %v2063
        %v2072 = vsub.f32 %v2018, %v2064
        %v2073 = vsub.f32 %v2021, %v2065
        %v2074 = vsub.f32 %v2024, %v2066
        %v2075 = vmul.f32 %v2067, %v2067
        %v2076 = vmul.f32 %v2068, %v2068
        %v2077 = vmul.f32 %v2069, %v2069
        %v2078 = vmul.f32 %v2070, %v2070
        %v2079 = vmul.f32 %v2071, %v2071
        %v2080 = vmul.f32 %v2072, %v2072
        %v2081 = vmul.f32 %v2073, %v2073
        %v2082 = vmul.f32 %v2074, %v2074
        %v2083 = vsel %vm1296, %v2075, 0.0
        %2084 = vadd.xlane.f32.xlu0 %v2083
        %v2085 = vpop.xlane.xlu0 %2084
        %v2086 = vsel %vm1296, %v2076, 0.0
        %2087 = vadd.xlane.f32.xlu0 %v2086
        %v2088 = vpop.xlane.xlu0 %2087
        %v2089 = vsel %vm1296, %v2077, 0.0
        %2090 = vadd.xlane.f32.xlu0 %v2089
        %v2091 = vpop.xlane.xlu0 %2090
        %v2092 = vsel %vm1296, %v2078, 0.0
        %2093 = vadd.xlane.f32.xlu0 %v2092
        %v2094 = vpop.xlane.xlu0 %2093
        %v2095 = vsel %vm1296, %v2079, 0.0
        %2096 = vadd.xlane.f32.xlu0 %v2095
        %v2097 = vpop.xlane.xlu0 %2096
        %v2098 = vsel %vm1296, %v2080, 0.0
        %2099 = vadd.xlane.f32.xlu0 %v2098
        %v2100 = vpop.xlane.xlu0 %2099
        %v2101 = vsel %vm1296, %v2081, 0.0
        %2102 = vadd.xlane.f32.xlu0 %v2101
        %v2103 = vpop.xlane.xlu0 %2102
        %v2104 = vsel %vm1296, %v2082, 0.0
        %2105 = vadd.xlane.f32.xlu0 %v2104
        %v2106 = vpop.xlane.xlu0 %2105
        %v2107 = vmul.f32 %v2085, %v2058
        %v2108 = vmul.f32 %v2088, %v2058
        %v2109 = vmul.f32 %v2091, %v2058
        %v2110 = vmul.f32 %v2094, %v2058
        %v2111 = vmul.f32 %v2097, %v2058
        %v2112 = vmul.f32 %v2100, %v2058
        %v2113 = vmul.f32 %v2103, %v2058
        %v2114 = vmul.f32 %v2106, %v2058
        %v2115 = vadd.f32 %v2107, 1e-05
        %v2116 = vadd.f32 %v2108, 1e-05
        %v2117 = vadd.f32 %v2109, 1e-05
        %v2118 = vadd.f32 %v2110, 1e-05
        %v2119 = vadd.f32 %v2111, 1e-05
        %v2120 = vadd.f32 %v2112, 1e-05
        %v2121 = vadd.f32 %v2113, 1e-05
        %v2122 = vadd.f32 %v2114, 1e-05
        %v2123 = vrsqrt.pop %v2115
        %v2124 = vmul.f32 %v2123, %v2115
        %v2125 = vmul.f32 %v2124, %v2123
        %v2126 = vmul.f32 0.5, %v2125
        %v2127 = vsub.f32 1.5, %v2126
        %v2128 = vmul.f32 %v2123, %v2127
        %vm2129 = vweird.f32 %v2115
        %vm2130 = vweird.f32 %v2123
        %vm2131 = vmor %vm2129, %vm2130
        %v2132 = vsel %vm2131, %v2123, %v2128
        %v2133 = vrsqrt.pop %v2116
        %v2134 = vmul.f32 %v2133, %v2116
        %v2135 = vmul.f32 %v2134, %v2133
        %v2136 = vmul.f32 0.5, %v2135
        %v2137 = vsub.f32 1.5, %v2136
        %v2138 = vmul.f32 %v2133, %v2137
        %vm2139 = vweird.f32 %v2116
        %vm2140 = vweird.f32 %v2133
        %vm2141 = vmor %vm2139, %vm2140
        %v2142 = vsel %vm2141, %v2133, %v2138
        %v2143 = vrsqrt.pop %v2117
        %v2144 = vmul.f32 %v2143, %v2117
        %v2145 = vmul.f32 %v2144, %v2143
        %v2146 = vmul.f32 0.5, %v2145
        %v2147 = vsub.f32 1.5, %v2146
        %v2148 = vmul.f32 %v2143, %v2147
        %vm2149 = vweird.f32 %v2117
        %vm2150 = vweird.f32 %v2143
        %vm2151 = vmor %vm2149, %vm2150
        %v2152 = vsel %vm2151, %v2143, %v2148
        %v2153 = vrsqrt.pop %v2118
        %v2154 = vmul.f32 %v2153, %v2118
        %v2155 = vmul.f32 %v2154, %v2153
        %v2156 = vmul.f32 0.5, %v2155
        %v2157 = vsub.f32 1.5, %v2156
        %v2158 = vmul.f32 %v2153, %v2157
        %vm2159 = vweird.f32 %v2118
        %vm2160 = vweird.f32 %v2153
        %vm2161 = vmor %vm2159, %vm2160
        %v2162 = vsel %vm2161, %v2153, %v2158
        %v2163 = vrsqrt.pop %v2119
        %v2164 = vmul.f32 %v2163, %v2119
        %v2165 = vmul.f32 %v2164, %v2163
        %v2166 = vmul.f32 0.5, %v2165
        %v2167 = vsub.f32 1.5, %v2166
        %v2168 = vmul.f32 %v2163, %v2167
        %vm2169 = vweird.f32 %v2119
        %vm2170 = vweird.f32 %v2163
        %vm2171 = vmor %vm2169, %vm2170
        %v2172 = vsel %vm2171, %v2163, %v2168
        %v2173 = vrsqrt.pop %v2120
        %v2174 = vmul.f32 %v2173, %v2120
        %v2175 = vmul.f32 %v2174, %v2173
        %v2176 = vmul.f32 0.5, %v2175
        %v2177 = vsub.f32 1.5, %v2176
        %v2178 = vmul.f32 %v2173, %v2177
        %vm2179 = vweird.f32 %v2120
        %vm2180 = vweird.f32 %v2173
        %vm2181 = vmor %vm2179, %vm2180
        %v2182 = vsel %vm2181, %v2173, %v2178
        %v2183 = vrsqrt.pop %v2121
        %v2184 = vmul.f32 %v2183, %v2121
        %v2185 = vmul.f32 %v2184, %v2183
        %v2186 = vmul.f32 0.5, %v2185
        %v2187 = vsub.f32 1.5, %v2186
        %v2188 = vmul.f32 %v2183, %v2187
        %vm2189 = vweird.f32 %v2121
        %vm2190 = vweird.f32 %v2183
        %vm2191 = vmor %vm2189, %vm2190
        %v2192 = vsel %vm2191, %v2183, %v2188
        %v2193 = vrsqrt.pop %v2122
        %v2194 = vmul.f32 %v2193, %v2122
        %v2195 = vmul.f32 %v2194, %v2193
        %v2196 = vmul.f32 0.5, %v2195
        %v2197 = vsub.f32 1.5, %v2196
        %v2198 = vmul.f32 %v2193, %v2197
        %vm2199 = vweird.f32 %v2122
        %vm2200 = vweird.f32 %v2193
        %vm2201 = vmor %vm2199, %vm2200
        %v2202 = vsel %vm2201, %v2193, %v2198
        %v2203 = vmul.f32 %v2067, %v2132
        %v2204 = vmul.f32 %v2068, %v2142
        %v2205 = vmul.f32 %v2069, %v2152
        %v2206 = vmul.f32 %v2070, %v2162
        %v2207 = vmul.f32 %v2071, %v2172
        %v2208 = vmul.f32 %v2072, %v2182
        %v2209 = vmul.f32 %v2073, %v2192
        %v2210 = vmul.f32 %v2074, %v2202
        %v2212 = vperm.slane %v2026, 0
        %v2214 = vmul.f32 %v2203, %v2212
        %v2215 = vmul.f32 %v2204, %v2212
        %v2216 = vmul.f32 %v2205, %v2212
        %v2217 = vmul.f32 %v2206, %v2212
        %v2218 = vmul.f32 %v2207, %v2212
        %v2219 = vmul.f32 %v2208, %v2212
        %v2220 = vmul.f32 %v2209, %v2212
        %v2221 = vmul.f32 %v2210, %v2212
        %v2223 = vperm.slane %v2027, 0
        %v2225 = vadd.f32 %v2214, %v2223
        %v2226 = vadd.f32 %v2215, %v2223
        %v2227 = vadd.f32 %v2216, %v2223
        %v2228 = vadd.f32 %v2217, %v2223
        %v2229 = vadd.f32 %v2218, %v2223
        %v2230 = vadd.f32 %v2219, %v2223
        %v2231 = vadd.f32 %v2220, %v2223
        %v2232 = vadd.f32 %v2221, %v2223
        %v2233 = vld [vmem:[%s25] sm:$0xff]
        %v2234 = vld [vmem:[%s25 + $0x8] sm:$0xff]
        %v2235 = vld [vmem:[%s25 + $0x10] sm:$0xff]
        %v2236 = vld [vmem:[%s25 + $0x18] sm:$0xff]
        %v2237 = vld [vmem:[%s25 + $0x20] sm:$0xff]
        %v2238 = vld [vmem:[%s26] sm:$0x1]
        %v2240 = vperm.slane %v2238, 0
        %v2243 = vsel %vm1296, %v2225, 0
        %v2246 = vsel %vm1296, %v2226, 0
        %v2249 = vsel %vm1296, %v2227, 0
        %v2252 = vsel %vm1296, %v2228, 0
        %v2255 = vsel %vm1296, %v2229, 0
        %v2258 = vsel %vm1296, %v2230, 0
        %v2261 = vsel %vm1296, %v2231, 0
        %v2264 = vsel %vm1296, %v2232, 0
        %2266 = vmatpush.msra.mxu0 0.0
        %2267 = vmatpush.msra.mxu0 0.0
        %2268 = vmatpush.msra.mxu0 0.0
        %2269 = vmatpush.msra.mxu0 0.0
        %2270 = vmatpush.msra.mxu0 0.0
        %2271 = vmatpush.msra.mxu0 0.0
        %2272 = vmatpush.msra.mxu0 0.0
        %2273 = vmatpush.msra.mxu0 0.0
        %2274 = vmatpush.msra.mxu0 0.0
        %2275 = vmatpush.msra.mxu0 0.0
        %2276 = vmatpush.msra.mxu0 0.0
        %2277 = vmatpush.msra.mxu0 %v2237
        %2278 = vmatpush.msra.mxu0 %v2236
        %2279 = vmatpush.msra.mxu0 %v2235
        %2280 = vmatpush.msra.mxu0 %v2234
        %2281 = vmatpush.msra.mxu0 %v2233
        %2282 = vmatmul.f32.gmra.mxu0 %v2243
        %v2283 = vpop.f32.mrf.mxu0
        %v2284 = vadd.f32 %v2240, %v2283
        %2285 = vmatmul.f32.gmra.mxu0 %v2246
        %v2286 = vpop.f32.mrf.mxu0
        %v2287 = vadd.f32 %v2240, %v2286
        %2288 = vmatmul.f32.gmra.mxu0 %v2249
        %v2289 = vpop.f32.mrf.mxu0
        %v2290 = vadd.f32 %v2240, %v2289
        %2291 = vmatmul.f32.gmra.mxu0 %v2252
        %v2292 = vpop.f32.mrf.mxu0
        %v2293 = vadd.f32 %v2240, %v2292
        %2294 = vmatmul.f32.gmra.mxu0 %v2255
        %v2295 = vpop.f32.mrf.mxu0
        %v2296 = vadd.f32 %v2240, %v2295
        %2297 = vmatmul.f32.gmra.mxu0 %v2258
        %v2298 = vpop.f32.mrf.mxu0
        %v2299 = vadd.f32 %v2240, %v2298
        %2300 = vmatmul.f32.gmra.mxu0 %v2261
        %v2301 = vpop.f32.mrf.mxu0
        %v2302 = vadd.f32 %v2240, %v2301
        %2303 = vmatmul.f32.gmra.mxu0 %v2264
        %v2304 = vpop.f32.mrf.mxu0
        %v2305 = vadd.f32 %v2240, %v2304
        %2306 = vdwg.mxu0
        %vm2307 = vcmask 195584
        %2308 = vst.msk [vmem:[%s869] sm:$0xff] %vm2307, %v2284
        %2309 = vst.msk [vmem:[%s869 + $0x8] sm:$0xff] %vm2307, %v2287
        %2310 = vst.msk [vmem:[%s869 + $0x10] sm:$0xff] %vm2307, %v2290
        %2311 = vst.msk [vmem:[%s869 + $0x18] sm:$0xff] %vm2307, %v2293
        %2312 = vst.msk [vmem:[%s869 + $0x20] sm:$0xff] %vm2307, %v2296
        %2313 = vst.msk [vmem:[%s869 + $0x28] sm:$0xff] %vm2307, %v2299
        %2314 = vst.msk [vmem:[%s869 + $0x30] sm:$0xff] %vm2307, %v2302
        %2315 = vst.msk [vmem:[%s869 + $0x38] sm:$0xff] %vm2307, %v2305
        %s2316 = sand.u32 %s628, 1
        %s2317 = scalar_lea.sflag [#allocation3], %s2316
        %s2318 = sand.u32 %s628, 1
        %s2319 = scalar_lea.vmem [#allocation2], %s2318
        %p2320 = scmp.lt.s32.totalorder %s43, 1
        %s2321 = scalar_select %p2320, %s43, 1
        %s2322 = smul.addr %s2321, 8
        %s2323 = smul.addr %s2322, 8
        %s2324 = scalar_lea.vmem %s28, %s2323
        // Predicated region
        $region129: #{_lambda_.1} parent=127 // pred_check
          %p2325 = pneg %p638
        $region130: #{_lambda_.1} parent=127 // pred_check_branch
          %2327 = sbr.rel (%p2325) target = $region132
        $region131: #{_lambda_.1} parent=127 // pred_region
          %2329 = vsyncadd %s2317, 0
          %s2330 = scalar_lea.hbm %s27, %s43
          %s2332 = sshll.u32 %s2319, 4
          %s2333 = int_to_ptr.vmem [resolvable:$true] %s2332
          %s2334 = sshll.u32 %s2330, 4
          %s2335 = int_to_ptr.hbm [resolvable:$true] %s2334
          %2337 = dma.vmem_to_hbm [thread:$0]  %s2333, 16, %s2335, %s2317
        $region132: #{_lambda_.1} parent=127 // pred_fallthru
          _
        // Predicated region
        $region133: #{_lambda_.1} parent=127 // pred_check
          %p2338 = pneg %p664
        $region134: #{_lambda_.1} parent=127 // pred_check_branch
          %2340 = sbr.rel (%p2338) target = $region136
        $region135: #{_lambda_.1} parent=127 // pred_region
          _
        $region136: #{_lambda_.1} parent=127 // pred_fallthru
          _
      $region128: #{_lambda_.1} parent=5 // pred_fallthru
        _
      %p2341 = scmp.le.s32.totalorder 2, %s38
      // Predicated region
      $region137: #{_lambda_.1} parent=5 // pred_check
        %p2342 = pneg %p2341
      $region138: #{_lambda_.1} parent=5 // pred_check_branch
        %2344 = sbr.rel (%p2342) target = $region140
      $region139: #{_lambda_.1} parent=5 // pred_region
        %s2345 = ssub.s32 %s38, 2
        // Predicated region
        $region141: #{_lambda_.1} parent=139 // pred_check
          %p2346 = pneg %p644
        $region142: #{_lambda_.1} parent=139 // pred_check_branch
          %2348 = sbr.rel (%p2346) target = $region144
        $region143: #{_lambda_.1} parent=139 // pred_region
          %s2349 = sand.u32 %s629, 1
          %s2350 = scalar_lea.sflag [#allocation3], %s2349
          %s2351 = sand.u32 %s629, 1
          %s2352 = scalar_lea.vmem [#allocation2], %s2351
          %2354 = dma.done %s2350, 16
        $region144: #{_lambda_.1} parent=139 // pred_fallthru
          _
        // Predicated region
        $region145: #{_lambda_.1} parent=139 // pred_check
          %p2355 = pneg %p670
        $region146: #{_lambda_.1} parent=139 // pred_check_branch
          %2357 = sbr.rel (%p2355) target = $region148
        $region147: #{_lambda_.1} parent=139 // pred_region
          %p2358 = scmp.lt.s32.totalorder %s44, 1
          %s2359 = scalar_select %p2358, %s44, 1
          %s2360 = smul.addr %s2359, 8
          %s2361 = smul.addr %s2360, 8
          %s2362 = scalar_lea.vmem %s28, %s2361
        $region148: #{_lambda_.1} parent=139 // pred_fallthru
          _
      $region140: #{_lambda_.1} parent=5 // pred_fallthru
        _
    $region6: #{_lambda_.1} parent=1 // loop_footer
      %s42 = sadd.s32 1, %s38
    $region7: #{_lambda_.1} parent=1 // loop_footer_branch
      %37 = sbr.rel target = $region3
    $region8: #{_lambda_.1} parent=1 // loop_exit
      _
    %2363 = vsyncpa [#allocation3], 1
    %s2364 = scalar_lea.sflag [#allocation3], 1
    %2365 = vsyncpa %s2364, 1

</llo_original>
